<compile_context>
chip_gen: v5e
topology: v5e:2x2
jax: 0.10.0
libtpu: 0.0.40
codegen_flags: <defaults>
</compile_context>

<pallas_src>
import jax
import jax.numpy as jnp
import numpy as np
from jax.experimental import pallas as pl
from jax.experimental.pallas import tpu as pltpu


def _target_type(rel):
    if rel in ("citing", "cited"):
        return "p"
    return rel.split("-")[-1]


# ---------------------------------------------------------------------------
# One-time packing: flatten valid (type, relation) pairs, pad FC output width
# to a lane-dense 128, and build a *static* Python plan used at trace time.
# ---------------------------------------------------------------------------
def prepare(graph, params, cfg):
    nt_rel, node_cnt = cfg["nt_rel"], cfg["node_cnt"]
    type_n = cfg["type_n"]
    types = list(nt_rel.keys())
    t_index = {t: i for i, t in enumerate(types)}
    T = len(types)
    ft, hid, hid2, out_ft = (cfg["ft_size"], cfg["hid_units"],
                             cfg["hid_units2"], cfg["out_ft"])
    out_pad = ((out_ft + 127) // 128) * 128          # lane-dense output width

    def blk(t):  # contiguous, type_n-aligned node ranges -> row-block index
        return int(np.asarray(node_cnt[t])[0]) // type_n

    P = sum(len(r) for r in nt_rel.values())         # number of valid pairs
    a_all = np.zeros((P, type_n, type_n), np.float32)
    w0_all = np.zeros((P, ft, hid), np.float32)
    b0_all = np.zeros((P, 1, hid), np.float32)
    w1_all = np.zeros((P, hid, hid2), np.float32)
    b1_all = np.zeros((P, 1, hid2), np.float32)
    wv_all = np.zeros((T, hid2, out_pad), np.float32)
    wf_all = np.zeros((T, ft, out_pad), np.float32)
    bfc_all = np.zeros((T, 1, out_pad), np.float32)

    plan_types = []
    p = 0
    for i, n in enumerate(types):
        rels = nt_rel[n]
        rel_entries = []
        for j, rel in enumerate(rels):
            t = _target_type(rel)
            a_all[p] = np.asarray(graph[n][j])
            w0, b0 = params["bnn"]["0" + rel]
            w1, b1 = params["bnn"]["1" + rel]
            w0_all[p] = np.asarray(w0)
            b0_all[p, 0] = np.asarray(b0)
            w1_all[p] = np.asarray(w1)
            b1_all[p, 0] = np.asarray(b1)
            rel_entries.append((p, t_index[t], blk(t)))   # (pair, src type, src block)
            p += 1
        wv, wf, bfc = params["fc"][n]
        wv_all[i, :, :out_ft] = np.asarray(wv)
        wf_all[i, :, :out_ft] = np.asarray(wf)
        bfc_all[i, 0, :out_ft] = np.asarray(bfc)
        inv_nrel = 1.0 / max(len(rels), 1)                # static mean scale
        plan_types.append((i, blk(n), inv_nrel, tuple(rel_entries)))

    plan = dict(type_n=type_n, hid=hid, hid2=hid2, out_ft=out_ft,
                out_pad=out_pad, node_size=cfg["node_size"],
                types=tuple(plan_types))
    arrays = dict(
        a_all=jnp.asarray(a_all, jnp.bfloat16),           # bf16 matmul operands
        w0_all=jnp.asarray(w0_all, jnp.bfloat16),
        b0_all=jnp.asarray(b0_all, jnp.float32),
        w1_all=jnp.asarray(w1_all, jnp.bfloat16),
        b1_all=jnp.asarray(b1_all, jnp.float32),
        wv_all=jnp.asarray(wv_all, jnp.bfloat16),
        wf_all=jnp.asarray(wf_all, jnp.bfloat16),
        bfc_all=jnp.asarray(bfc_all, jnp.float32),
    )
    return plan, arrays


# ---------------------------------------------------------------------------
# modeler.forward : one fused pallas_call (no grid, full arrays in VMEM)
# ---------------------------------------------------------------------------
def make_forward(plan):
    type_n = plan["type_n"]
    hid, hid2 = plan["hid"], plan["hid2"]
    out_ft, out_pad = plan["out_ft"], plan["out_pad"]
    node_size = plan["node_size"]
    types = plan["types"]
    f32, bf16 = jnp.float32, jnp.bfloat16

    def kernel(feat_ref, a_ref, w0_ref, b0_ref, w1_ref, b1_ref,
               wv_ref, wf_ref, bfc_ref, o_ref):
        # ---- layer 1: embs1[i] = mean_rel relu((A @ feat_src) @ W0 + b0)
        embs1 = [None] * len(types)
        for (i, dst_blk, inv_nrel, rel_entries) in types:
            acc = jnp.zeros((type_n, hid), f32)
            for (p, src_i, src_blk) in rel_entries:
                x = feat_ref[pl.ds(src_blk * type_n, type_n), :]
                mn = jnp.dot(a_ref[p], x, preferred_element_type=f32)
                v = jnp.dot(mn.astype(bf16), w0_ref[p],
                            preferred_element_type=f32) + b0_ref[p]
                acc = acc + jnp.maximum(v, 0.0)
            embs1[i] = (acc * inv_nrel).astype(bf16)       # stays in VMEM/vregs

        # ---- layer 2 + FullyConnect(hstack(v_summary, feat)) per type
        for (i, dst_blk, inv_nrel, rel_entries) in types:
            acc = jnp.zeros((type_n, hid2), f32)
            for (p, src_i, src_blk) in rel_entries:
                mn = jnp.dot(a_ref[p], embs1[src_i], preferred_element_type=f32)
                v = jnp.dot(mn.astype(bf16), w1_ref[p],
                            preferred_element_type=f32) + b1_ref[p]
                acc = acc + jnp.maximum(v, 0.0)
            v_summary = (acc * inv_nrel).astype(bf16)
            feat_dst = feat_ref[pl.ds(dst_blk * type_n, type_n), :]
            # split-weight FC:  concat([v, feat]) @ W + b == v@Wv + feat@Wf + b
            out = (jnp.dot(v_summary, wv_ref[i], preferred_element_type=f32)
                   + jnp.dot(feat_dst, wf_ref[i], preferred_element_type=f32)
                   + bfc_ref[i])
            o_ref[pl.ds(dst_blk * type_n, type_n), :] = out.astype(o_ref.dtype)

    vmem = pltpu.MemorySpace.VMEM
    call = pl.pallas_call(
        kernel,
        out_shape=jax.ShapeDtypeStruct((node_size, out_pad), jnp.float32),
        in_specs=[pl.BlockSpec(memory_space=vmem)] * 9,
        out_specs=pl.BlockSpec(memory_space=vmem),
    )

    @jax.jit
    def forward(arrays, features):
        feat_bf = features.astype(bf16)
        padded = call(feat_bf,
                      arrays["a_all"], arrays["w0_all"], arrays["b0_all"],
                      arrays["w1_all"], arrays["b1_all"],
                      arrays["wv_all"], arrays["wf_all"], arrays["bfc_all"])
        return padded[:, :out_ft]

    return forward


# ---------------------------------------------------------------------------
# Pure-JAX reference (mirrors the same bf16-operand / f32-accumulate math)
# ---------------------------------------------------------------------------
def modeler_forward_ref(graph, features, params, cfg):
    node_size, hid_units, out_ft = cfg["node_size"], cfg["hid_units"], cfg["out_ft"]
    nt_rel, node_cnt = cfg["nt_rel"], cfg["node_cnt"]
    bf, f32 = jnp.bfloat16, jnp.float32
    feat_bf = features.astype(bf)
    embs1 = jnp.zeros((node_size, hid_units), bf)
    embs2 = jnp.zeros((node_size, out_ft), f32)
    for n, rels in nt_rel.items():
        vec = []
        for j, rel in enumerate(rels):
            t = _target_type(rel)
            w, b = params["bnn"]["0" + rel]
            mn = jnp.dot(graph[n][j].astype(bf), feat_bf[node_cnt[t]],
                         preferred_element_type=f32)
            v = jnp.dot(mn.astype(bf), w.astype(bf),
                        preferred_element_type=f32) + b
            vec.append(jnp.maximum(v, 0.0))
        vsum = jnp.mean(jnp.stack(vec, 0), 0)
        embs1 = embs1.at[node_cnt[n]].set(vsum.astype(bf))
    for n, rels in nt_rel.items():
        vec = []
        for j, rel in enumerate(rels):
            t = _target_type(rel)
            w, b = params["bnn"]["1" + rel]
            mn = jnp.dot(graph[n][j].astype(bf), embs1[node_cnt[t]],
                         preferred_element_type=f32)
            v = jnp.dot(mn.astype(bf), w.astype(bf),
                        preferred_element_type=f32) + b
            vec.append(jnp.maximum(v, 0.0))
        vsum = jnp.mean(jnp.stack(vec, 0), 0)
        w1, w2, bfc = params["fc"][n]
        out = (jnp.dot(vsum.astype(bf), w1.astype(bf), preferred_element_type=f32)
               + jnp.dot(feat_bf[node_cnt[n]], w2.astype(bf), preferred_element_type=f32)
               + bfc)
        embs2 = embs2.at[node_cnt[n]].set(out)
    return embs2


# ---------------------------------------------------------------------------
# Deterministic parameter / input construction
# ---------------------------------------------------------------------------
def _xavier(key, shape):
    fan_in, fan_out = shape
    lim = np.sqrt(6.0 / (fan_in + fan_out))
    return jax.random.uniform(key, shape, jnp.float32, -lim, lim)


def build_everything():
    type_n = 64
    ft_size, hid_units, hid_units2, out_ft = 32, 32, 32, 32
    nt_rel = {"p": ["citing", "p-a"], "a": ["a-p"]}
    node_cnt = {"p": jnp.arange(0, type_n), "a": jnp.arange(type_n, 2 * type_n)}
    type_size = {"p": type_n, "a": type_n}
    cfg = dict(node_size=2 * type_n, type_n=type_n, ft_size=ft_size,
               hid_units=hid_units, hid_units2=hid_units2, out_ft=out_ft,
               nt_rel=nt_rel, node_cnt=node_cnt)

    key = jax.random.PRNGKey(0)
    keys = iter(jax.random.split(key, 64))

    features = jax.random.normal(next(keys), (cfg["node_size"], ft_size),
                                 jnp.float32)

    # row-normalized dense adjacency (stand-in for torch sparse spmm)
    graph = {}
    for n, rels in nt_rel.items():
        mats = []
        for rel in rels:
            t = _target_type(rel)
            raw = jax.random.uniform(next(keys), (type_size[n], type_size[t]),
                                     jnp.float32)
            mats.append(raw / jnp.sum(raw, axis=1, keepdims=True))
        graph[n] = mats

    params = {"bnn": {}, "fc": {}}
    for n, rels in nt_rel.items():
        for rel in rels:
            params["bnn"]["0" + rel] = (
                _xavier(next(keys), (ft_size, hid_units)),
                jnp.zeros((hid_units,), jnp.float32) + 0.01,
            )
            params["bnn"]["1" + rel] = (
                _xavier(next(keys), (hid_units, hid_units2)),
                jnp.zeros((hid_units2,), jnp.float32) + 0.01,
            )
        params["fc"][n] = (
            _xavier(next(keys), (hid_units2, out_ft)),
            _xavier(next(keys), (ft_size, out_ft)),
            jnp.zeros((out_ft,), jnp.float32),
        )
    return graph, features, params, cfg


if __name__ == "__main__":
    graph, features, params, cfg = build_everything()
    plan, arrays = prepare(graph, params, cfg)

    fwd = make_forward(plan)
    embs2 = jax.block_until_ready(fwd(arrays, features))

    ref = jax.block_until_ready(modeler_forward_ref(graph, features, params, cfg))
    np.testing.assert_allclose(np.asarray(embs2), np.asarray(ref),
                               rtol=1e-3, atol=1e-3)

    print("KERNEL_OK")
</pallas_src>

<mosaic_0001>
module attributes {stable_mosaic.version = 11 : i64} {
  func.func @kernel(%arg0: memref<128x32xbf16, #tpu.memory_space<vmem>>, %arg1: memref<3x64x64xbf16, #tpu.memory_space<vmem>>, %arg2: memref<3x32x32xbf16, #tpu.memory_space<vmem>>, %arg3: memref<3x1x32xf32, #tpu.memory_space<vmem>>, %arg4: memref<3x32x32xbf16, #tpu.memory_space<vmem>>, %arg5: memref<3x1x32xf32, #tpu.memory_space<vmem>>, %arg6: memref<2x32x128xbf16, #tpu.memory_space<vmem>>, %arg7: memref<2x32x128xbf16, #tpu.memory_space<vmem>>, %arg8: memref<2x1x128xf32, #tpu.memory_space<vmem>>, %arg9: memref<128x128xf32, #tpu.memory_space<vmem>>) attributes {dimension_semantics = [], scalar_prefetch = 0 : i64, scratch_operands = 0 : i64, tpu.core_type = #tpu.core_type<tc>} {
    %cst = arith.constant 0.000000e+00 : f32
    %0 = vector.broadcast %cst : f32 to vector<64x32xf32>
    %c0 = arith.constant 0 : index
    %c0_0 = arith.constant 0 : index
    %1 = vector.load %arg0[%c0, %c0_0] : memref<128x32xbf16, #tpu.memory_space<vmem>>, vector<64x32xbf16>
    %c0_1 = arith.constant 0 : index
    %c0_2 = arith.constant 0 : index
    %c0_3 = arith.constant 0 : index
    %2 = vector.load %arg1[%c0_1, %c0_2, %c0_3] : memref<3x64x64xbf16, #tpu.memory_space<vmem>>, vector<1x64x64xbf16>
    %3 = vector.shape_cast %2 : vector<1x64x64xbf16> to vector<64x64xbf16>
    %cst_4 = arith.constant dense<0.000000e+00> : vector<64x32xf32>
    %4 = tpu.matmul %3, %1, %cst_4 {dimension_numbers = #tpu.dot_dimension_numbers<[1], [0], [0], [1], [0, 0, 1, 1], [], []>} : vector<64x64xbf16>, vector<64x32xbf16>, vector<64x32xf32> -> vector<64x32xf32>
    %5 = arith.truncf %4 : vector<64x32xf32> to vector<64x32xbf16>
    %c0_5 = arith.constant 0 : index
    %c0_6 = arith.constant 0 : index
    %c0_7 = arith.constant 0 : index
    %6 = vector.load %arg2[%c0_5, %c0_6, %c0_7] : memref<3x32x32xbf16, #tpu.memory_space<vmem>>, vector<1x32x32xbf16>
    %7 = vector.shape_cast %6 : vector<1x32x32xbf16> to vector<32x32xbf16>
    %cst_8 = arith.constant dense<0.000000e+00> : vector<64x32xf32>
    %8 = tpu.matmul %5, %7, %cst_8 {dimension_numbers = #tpu.dot_dimension_numbers<[1], [0], [0], [1], [0, 0, 1, 1], [], []>} : vector<64x32xbf16>, vector<32x32xbf16>, vector<64x32xf32> -> vector<64x32xf32>
    %c0_9 = arith.constant 0 : index
    %c0_10 = arith.constant 0 : index
    %c0_11 = arith.constant 0 : index
    %9 = vector.load %arg3[%c0_9, %c0_10, %c0_11] : memref<3x1x32xf32, #tpu.memory_space<vmem>>, vector<1x1x32xf32>
    %10 = vector.shape_cast %9 : vector<1x1x32xf32> to vector<1x32xf32>
    %11 = vector.broadcast %10 : vector<1x32xf32> to vector<64x32xf32>
    %12 = arith.addf %8, %11 : vector<64x32xf32>
    %cst_12 = arith.constant 0.000000e+00 : f32
    %13 = vector.broadcast %cst_12 : f32 to vector<64x32xf32>
    %14 = arith.maximumf %12, %13 : vector<64x32xf32>
    %15 = arith.addf %0, %14 : vector<64x32xf32>
    %c64 = arith.constant 64 : index
    %c0_13 = arith.constant 0 : index
    %16 = vector.load %arg0[%c64, %c0_13] : memref<128x32xbf16, #tpu.memory_space<vmem>>, vector<64x32xbf16>
    %c1 = arith.constant 1 : index
    %c0_14 = arith.constant 0 : index
    %c0_15 = arith.constant 0 : index
    %17 = vector.load %arg1[%c1, %c0_14, %c0_15] : memref<3x64x64xbf16, #tpu.memory_space<vmem>>, vector<1x64x64xbf16>
    %18 = vector.shape_cast %17 : vector<1x64x64xbf16> to vector<64x64xbf16>
    %cst_16 = arith.constant dense<0.000000e+00> : vector<64x32xf32>
    %19 = tpu.matmul %18, %16, %cst_16 {dimension_numbers = #tpu.dot_dimension_numbers<[1], [0], [0], [1], [0, 0, 1, 1], [], []>} : vector<64x64xbf16>, vector<64x32xbf16>, vector<64x32xf32> -> vector<64x32xf32>
    %20 = arith.truncf %19 : vector<64x32xf32> to vector<64x32xbf16>
    %c1_17 = arith.constant 1 : index
    %c0_18 = arith.constant 0 : index
    %c0_19 = arith.constant 0 : index
    %21 = vector.load %arg2[%c1_17, %c0_18, %c0_19] : memref<3x32x32xbf16, #tpu.memory_space<vmem>>, vector<1x32x32xbf16>
    %22 = vector.shape_cast %21 : vector<1x32x32xbf16> to vector<32x32xbf16>
    %cst_20 = arith.constant dense<0.000000e+00> : vector<64x32xf32>
    %23 = tpu.matmul %20, %22, %cst_20 {dimension_numbers = #tpu.dot_dimension_numbers<[1], [0], [0], [1], [0, 0, 1, 1], [], []>} : vector<64x32xbf16>, vector<32x32xbf16>, vector<64x32xf32> -> vector<64x32xf32>
    %c1_21 = arith.constant 1 : index
    %c0_22 = arith.constant 0 : index
    %c0_23 = arith.constant 0 : index
    %24 = vector.load %arg3[%c1_21, %c0_22, %c0_23] : memref<3x1x32xf32, #tpu.memory_space<vmem>>, vector<1x1x32xf32>
    %25 = vector.shape_cast %24 : vector<1x1x32xf32> to vector<1x32xf32>
    %26 = vector.broadcast %25 : vector<1x32xf32> to vector<64x32xf32>
    %27 = arith.addf %23, %26 : vector<64x32xf32>
    %cst_24 = arith.constant 0.000000e+00 : f32
    %28 = vector.broadcast %cst_24 : f32 to vector<64x32xf32>
    %29 = arith.maximumf %27, %28 : vector<64x32xf32>
    %30 = arith.addf %15, %29 : vector<64x32xf32>
    %cst_25 = arith.constant 5.000000e-01 : f32
    %31 = vector.broadcast %cst_25 : f32 to vector<64x32xf32>
    %32 = arith.mulf %30, %31 : vector<64x32xf32>
    %33 = arith.truncf %32 : vector<64x32xf32> to vector<64x32xbf16>
    %cst_26 = arith.constant 0.000000e+00 : f32
    %34 = vector.broadcast %cst_26 : f32 to vector<64x32xf32>
    %c0_27 = arith.constant 0 : index
    %c0_28 = arith.constant 0 : index
    %35 = vector.load %arg0[%c0_27, %c0_28] : memref<128x32xbf16, #tpu.memory_space<vmem>>, vector<64x32xbf16>
    %c2 = arith.constant 2 : index
    %c0_29 = arith.constant 0 : index
    %c0_30 = arith.constant 0 : index
    %36 = vector.load %arg1[%c2, %c0_29, %c0_30] : memref<3x64x64xbf16, #tpu.memory_space<vmem>>, vector<1x64x64xbf16>
    %37 = vector.shape_cast %36 : vector<1x64x64xbf16> to vector<64x64xbf16>
    %cst_31 = arith.constant dense<0.000000e+00> : vector<64x32xf32>
    %38 = tpu.matmul %37, %35, %cst_31 {dimension_numbers = #tpu.dot_dimension_numbers<[1], [0], [0], [1], [0, 0, 1, 1], [], []>} : vector<64x64xbf16>, vector<64x32xbf16>, vector<64x32xf32> -> vector<64x32xf32>
    %39 = arith.truncf %38 : vector<64x32xf32> to vector<64x32xbf16>
    %c2_32 = arith.constant 2 : index
    %c0_33 = arith.constant 0 : index
    %c0_34 = arith.constant 0 : index
    %40 = vector.load %arg2[%c2_32, %c0_33, %c0_34] : memref<3x32x32xbf16, #tpu.memory_space<vmem>>, vector<1x32x32xbf16>
    %41 = vector.shape_cast %40 : vector<1x32x32xbf16> to vector<32x32xbf16>
    %cst_35 = arith.constant dense<0.000000e+00> : vector<64x32xf32>
    %42 = tpu.matmul %39, %41, %cst_35 {dimension_numbers = #tpu.dot_dimension_numbers<[1], [0], [0], [1], [0, 0, 1, 1], [], []>} : vector<64x32xbf16>, vector<32x32xbf16>, vector<64x32xf32> -> vector<64x32xf32>
    %c2_36 = arith.constant 2 : index
    %c0_37 = arith.constant 0 : index
    %c0_38 = arith.constant 0 : index
    %43 = vector.load %arg3[%c2_36, %c0_37, %c0_38] : memref<3x1x32xf32, #tpu.memory_space<vmem>>, vector<1x1x32xf32>
    %44 = vector.shape_cast %43 : vector<1x1x32xf32> to vector<1x32xf32>
    %45 = vector.broadcast %44 : vector<1x32xf32> to vector<64x32xf32>
    %46 = arith.addf %42, %45 : vector<64x32xf32>
    %cst_39 = arith.constant 0.000000e+00 : f32
    %47 = vector.broadcast %cst_39 : f32 to vector<64x32xf32>
    %48 = arith.maximumf %46, %47 : vector<64x32xf32>
    %49 = arith.addf %34, %48 : vector<64x32xf32>
    %cst_40 = arith.constant 1.000000e+00 : f32
    %50 = vector.broadcast %cst_40 : f32 to vector<64x32xf32>
    %51 = arith.mulf %49, %50 : vector<64x32xf32>
    %52 = arith.truncf %51 : vector<64x32xf32> to vector<64x32xbf16>
    %cst_41 = arith.constant 0.000000e+00 : f32
    %53 = vector.broadcast %cst_41 : f32 to vector<64x32xf32>
    %c0_42 = arith.constant 0 : index
    %c0_43 = arith.constant 0 : index
    %c0_44 = arith.constant 0 : index
    %54 = vector.load %arg1[%c0_42, %c0_43, %c0_44] : memref<3x64x64xbf16, #tpu.memory_space<vmem>>, vector<1x64x64xbf16>
    %55 = vector.shape_cast %54 : vector<1x64x64xbf16> to vector<64x64xbf16>
    %cst_45 = arith.constant dense<0.000000e+00> : vector<64x32xf32>
    %56 = tpu.matmul %55, %33, %cst_45 {dimension_numbers = #tpu.dot_dimension_numbers<[1], [0], [0], [1], [0, 0, 1, 1], [], []>} : vector<64x64xbf16>, vector<64x32xbf16>, vector<64x32xf32> -> vector<64x32xf32>
    %57 = arith.truncf %56 : vector<64x32xf32> to vector<64x32xbf16>
    %c0_46 = arith.constant 0 : index
    %c0_47 = arith.constant 0 : index
    %c0_48 = arith.constant 0 : index
    %58 = vector.load %arg4[%c0_46, %c0_47, %c0_48] : memref<3x32x32xbf16, #tpu.memory_space<vmem>>, vector<1x32x32xbf16>
    %59 = vector.shape_cast %58 : vector<1x32x32xbf16> to vector<32x32xbf16>
    %cst_49 = arith.constant dense<0.000000e+00> : vector<64x32xf32>
    %60 = tpu.matmul %57, %59, %cst_49 {dimension_numbers = #tpu.dot_dimension_numbers<[1], [0], [0], [1], [0, 0, 1, 1], [], []>} : vector<64x32xbf16>, vector<32x32xbf16>, vector<64x32xf32> -> vector<64x32xf32>
    %c0_50 = arith.constant 0 : index
    %c0_51 = arith.constant 0 : index
    %c0_52 = arith.constant 0 : index
    %61 = vector.load %arg5[%c0_50, %c0_51, %c0_52] : memref<3x1x32xf32, #tpu.memory_space<vmem>>, vector<1x1x32xf32>
    %62 = vector.shape_cast %61 : vector<1x1x32xf32> to vector<1x32xf32>
    %63 = vector.broadcast %62 : vector<1x32xf32> to vector<64x32xf32>
    %64 = arith.addf %60, %63 : vector<64x32xf32>
    %cst_53 = arith.constant 0.000000e+00 : f32
    %65 = vector.broadcast %cst_53 : f32 to vector<64x32xf32>
    %66 = arith.maximumf %64, %65 : vector<64x32xf32>
    %67 = arith.addf %53, %66 : vector<64x32xf32>
    %c1_54 = arith.constant 1 : index
    %c0_55 = arith.constant 0 : index
    %c0_56 = arith.constant 0 : index
    %68 = vector.load %arg1[%c1_54, %c0_55, %c0_56] : memref<3x64x64xbf16, #tpu.memory_space<vmem>>, vector<1x64x64xbf16>
    %69 = vector.shape_cast %68 : vector<1x64x64xbf16> to vector<64x64xbf16>
    %cst_57 = arith.constant dense<0.000000e+00> : vector<64x32xf32>
    %70 = tpu.matmul %69, %52, %cst_57 {dimension_numbers = #tpu.dot_dimension_numbers<[1], [0], [0], [1], [0, 0, 1, 1], [], []>} : vector<64x64xbf16>, vector<64x32xbf16>, vector<64x32xf32> -> vector<64x32xf32>
    %71 = arith.truncf %70 : vector<64x32xf32> to vector<64x32xbf16>
    %c1_58 = arith.constant 1 : index
    %c0_59 = arith.constant 0 : index
    %c0_60 = arith.constant 0 : index
    %72 = vector.load %arg4[%c1_58, %c0_59, %c0_60] : memref<3x32x32xbf16, #tpu.memory_space<vmem>>, vector<1x32x32xbf16>
    %73 = vector.shape_cast %72 : vector<1x32x32xbf16> to vector<32x32xbf16>
    %cst_61 = arith.constant dense<0.000000e+00> : vector<64x32xf32>
    %74 = tpu.matmul %71, %73, %cst_61 {dimension_numbers = #tpu.dot_dimension_numbers<[1], [0], [0], [1], [0, 0, 1, 1], [], []>} : vector<64x32xbf16>, vector<32x32xbf16>, vector<64x32xf32> -> vector<64x32xf32>
    %c1_62 = arith.constant 1 : index
    %c0_63 = arith.constant 0 : index
    %c0_64 = arith.constant 0 : index
    %75 = vector.load %arg5[%c1_62, %c0_63, %c0_64] : memref<3x1x32xf32, #tpu.memory_space<vmem>>, vector<1x1x32xf32>
    %76 = vector.shape_cast %75 : vector<1x1x32xf32> to vector<1x32xf32>
    %77 = vector.broadcast %76 : vector<1x32xf32> to vector<64x32xf32>
    %78 = arith.addf %74, %77 : vector<64x32xf32>
    %cst_65 = arith.constant 0.000000e+00 : f32
    %79 = vector.broadcast %cst_65 : f32 to vector<64x32xf32>
    %80 = arith.maximumf %78, %79 : vector<64x32xf32>
    %81 = arith.addf %67, %80 : vector<64x32xf32>
    %cst_66 = arith.constant 5.000000e-01 : f32
    %82 = vector.broadcast %cst_66 : f32 to vector<64x32xf32>
    %83 = arith.mulf %81, %82 : vector<64x32xf32>
    %84 = arith.truncf %83 : vector<64x32xf32> to vector<64x32xbf16>
    %c0_67 = arith.constant 0 : index
    %c0_68 = arith.constant 0 : index
    %85 = vector.load %arg0[%c0_67, %c0_68] : memref<128x32xbf16, #tpu.memory_space<vmem>>, vector<64x32xbf16>
    %c0_69 = arith.constant 0 : index
    %c0_70 = arith.constant 0 : index
    %c0_71 = arith.constant 0 : index
    %86 = vector.load %arg6[%c0_69, %c0_70, %c0_71] : memref<2x32x128xbf16, #tpu.memory_space<vmem>>, vector<1x32x128xbf16>
    %87 = vector.shape_cast %86 : vector<1x32x128xbf16> to vector<32x128xbf16>
    %cst_72 = arith.constant dense<0.000000e+00> : vector<64x128xf32>
    %88 = tpu.matmul %84, %87, %cst_72 {dimension_numbers = #tpu.dot_dimension_numbers<[1], [0], [0], [1], [0, 0, 1, 1], [], []>} : vector<64x32xbf16>, vector<32x128xbf16>, vector<64x128xf32> -> vector<64x128xf32>
    %c0_73 = arith.constant 0 : index
    %c0_74 = arith.constant 0 : index
    %c0_75 = arith.constant 0 : index
    %89 = vector.load %arg7[%c0_73, %c0_74, %c0_75] : memref<2x32x128xbf16, #tpu.memory_space<vmem>>, vector<1x32x128xbf16>
    %90 = vector.shape_cast %89 : vector<1x32x128xbf16> to vector<32x128xbf16>
    %cst_76 = arith.constant dense<0.000000e+00> : vector<64x128xf32>
    %91 = tpu.matmul %85, %90, %cst_76 {dimension_numbers = #tpu.dot_dimension_numbers<[1], [0], [0], [1], [0, 0, 1, 1], [], []>} : vector<64x32xbf16>, vector<32x128xbf16>, vector<64x128xf32> -> vector<64x128xf32>
    %92 = arith.addf %88, %91 : vector<64x128xf32>
    %c0_77 = arith.constant 0 : index
    %c0_78 = arith.constant 0 : index
    %c0_79 = arith.constant 0 : index
    %93 = vector.load %arg8[%c0_77, %c0_78, %c0_79] : memref<2x1x128xf32, #tpu.memory_space<vmem>>, vector<1x1x128xf32>
    %94 = vector.shape_cast %93 : vector<1x1x128xf32> to vector<1x128xf32>
    %95 = vector.broadcast %94 : vector<1x128xf32> to vector<64x128xf32>
    %96 = arith.addf %92, %95 : vector<64x128xf32>
    %c0_80 = arith.constant 0 : index
    %c0_81 = arith.constant 0 : index
    %97 = vector.load %arg9[%c0_80, %c0_81] : memref<128x128xf32, #tpu.memory_space<vmem>>, vector<64x128xf32>
    tpu.vector_store %arg9[%c0_80, %c0_81], %96 {strides = array<i32>} : memref<128x128xf32, #tpu.memory_space<vmem>>, vector<64x128xf32>,
    %cst_82 = arith.constant 0.000000e+00 : f32
    %98 = vector.broadcast %cst_82 : f32 to vector<64x32xf32>
    %c2_83 = arith.constant 2 : index
    %c0_84 = arith.constant 0 : index
    %c0_85 = arith.constant 0 : index
    %99 = vector.load %arg1[%c2_83, %c0_84, %c0_85] : memref<3x64x64xbf16, #tpu.memory_space<vmem>>, vector<1x64x64xbf16>
    %100 = vector.shape_cast %99 : vector<1x64x64xbf16> to vector<64x64xbf16>
    %cst_86 = arith.constant dense<0.000000e+00> : vector<64x32xf32>
    %101 = tpu.matmul %100, %33, %cst_86 {dimension_numbers = #tpu.dot_dimension_numbers<[1], [0], [0], [1], [0, 0, 1, 1], [], []>} : vector<64x64xbf16>, vector<64x32xbf16>, vector<64x32xf32> -> vector<64x32xf32>
    %102 = arith.truncf %101 : vector<64x32xf32> to vector<64x32xbf16>
    %c2_87 = arith.constant 2 : index
    %c0_88 = arith.constant 0 : index
    %c0_89 = arith.constant 0 : index
    %103 = vector.load %arg4[%c2_87, %c0_88, %c0_89] : memref<3x32x32xbf16, #tpu.memory_space<vmem>>, vector<1x32x32xbf16>
    %104 = vector.shape_cast %103 : vector<1x32x32xbf16> to vector<32x32xbf16>
    %cst_90 = arith.constant dense<0.000000e+00> : vector<64x32xf32>
    %105 = tpu.matmul %102, %104, %cst_90 {dimension_numbers = #tpu.dot_dimension_numbers<[1], [0], [0], [1], [0, 0, 1, 1], [], []>} : vector<64x32xbf16>, vector<32x32xbf16>, vector<64x32xf32> -> vector<64x32xf32>
    %c2_91 = arith.constant 2 : index
    %c0_92 = arith.constant 0 : index
    %c0_93 = arith.constant 0 : index
    %106 = vector.load %arg5[%c2_91, %c0_92, %c0_93] : memref<3x1x32xf32, #tpu.memory_space<vmem>>, vector<1x1x32xf32>
    %107 = vector.shape_cast %106 : vector<1x1x32xf32> to vector<1x32xf32>
    %108 = vector.broadcast %107 : vector<1x32xf32> to vector<64x32xf32>
    %109 = arith.addf %105, %108 : vector<64x32xf32>
    %cst_94 = arith.constant 0.000000e+00 : f32
    %110 = vector.broadcast %cst_94 : f32 to vector<64x32xf32>
    %111 = arith.maximumf %109, %110 : vector<64x32xf32>
    %112 = arith.addf %98, %111 : vector<64x32xf32>
    %cst_95 = arith.constant 1.000000e+00 : f32
    %113 = vector.broadcast %cst_95 : f32 to vector<64x32xf32>
    %114 = arith.mulf %112, %113 : vector<64x32xf32>
    %115 = arith.truncf %114 : vector<64x32xf32> to vector<64x32xbf16>
    %c64_96 = arith.constant 64 : index
    %c0_97 = arith.constant 0 : index
    %116 = vector.load %arg0[%c64_96, %c0_97] : memref<128x32xbf16, #tpu.memory_space<vmem>>, vector<64x32xbf16>
    %c1_98 = arith.constant 1 : index
    %c0_99 = arith.constant 0 : index
    %c0_100 = arith.constant 0 : index
    %117 = vector.load %arg6[%c1_98, %c0_99, %c0_100] : memref<2x32x128xbf16, #tpu.memory_space<vmem>>, vector<1x32x128xbf16>
    %118 = vector.shape_cast %117 : vector<1x32x128xbf16> to vector<32x128xbf16>
    %cst_101 = arith.constant dense<0.000000e+00> : vector<64x128xf32>
    %119 = tpu.matmul %115, %118, %cst_101 {dimension_numbers = #tpu.dot_dimension_numbers<[1], [0], [0], [1], [0, 0, 1, 1], [], []>} : vector<64x32xbf16>, vector<32x128xbf16>, vector<64x128xf32> -> vector<64x128xf32>
    %c1_102 = arith.constant 1 : index
    %c0_103 = arith.constant 0 : index
    %c0_104 = arith.constant 0 : index
    %120 = vector.load %arg7[%c1_102, %c0_103, %c0_104] : memref<2x32x128xbf16, #tpu.memory_space<vmem>>, vector<1x32x128xbf16>
    %121 = vector.shape_cast %120 : vector<1x32x128xbf16> to vector<32x128xbf16>
    %cst_105 = arith.constant dense<0.000000e+00> : vector<64x128xf32>
    %122 = tpu.matmul %116, %121, %cst_105 {dimension_numbers = #tpu.dot_dimension_numbers<[1], [0], [0], [1], [0, 0, 1, 1], [], []>} : vector<64x32xbf16>, vector<32x128xbf16>, vector<64x128xf32> -> vector<64x128xf32>
    %123 = arith.addf %119, %122 : vector<64x128xf32>
    %c1_106 = arith.constant 1 : index
    %c0_107 = arith.constant 0 : index
    %c0_108 = arith.constant 0 : index
    %124 = vector.load %arg8[%c1_106, %c0_107, %c0_108] : memref<2x1x128xf32, #tpu.memory_space<vmem>>, vector<1x1x128xf32>
    %125 = vector.shape_cast %124 : vector<1x1x128xf32> to vector<1x128xf32>
    %126 = vector.broadcast %125 : vector<1x128xf32> to vector<64x128xf32>
    %127 = arith.addf %123, %126 : vector<64x128xf32>
    %c64_109 = arith.constant 64 : index
    %c0_110 = arith.constant 0 : index
    %128 = vector.load %arg9[%c64_109, %c0_110] : memref<128x128xf32, #tpu.memory_space<vmem>>, vector<64x128xf32>
    tpu.vector_store %arg9[%c64_109, %c0_110], %127 {strides = array<i32>} : memref<128x128xf32, #tpu.memory_space<vmem>>, vector<64x128xf32>,
    return
  }
}

</mosaic_0001>

<llo_original>
// kernel: forward.1
$region0: #{forward.1}
  #allocation0 [shape = 'u32[]', space=smem, size = 0x4, offset = 0x4, fixed_abs, tag = 'smem constant byte address 0x4 - core index']
  #allocation1 [shape = 'u32[72,128]{1,0:T(1,128)}', space=vmem, size = 0x9000, scoped, tag = 'internal scratch']
  %s0 = inlined_call_operand.vmem [shape: bf16[128,32], index: 0, kind: input, shape index: {}]
  %s1 = inlined_call_operand.vmem [shape: bf16[3,64,64], index: 1, kind: input, shape index: {}]
  %s2 = inlined_call_operand.hbm [shape: bf16[3,32,32], index: 2, kind: input, shape index: {}]
  %s3 = inlined_call_operand.hbm [shape: f32[3,1,32], index: 3, kind: input, shape index: {}]
  %s4 = inlined_call_operand.hbm [shape: bf16[3,32,32], index: 4, kind: input, shape index: {}]
  %s5 = inlined_call_operand.hbm [shape: f32[3,1,32], index: 5, kind: input, shape index: {}]
  %s6 = inlined_call_operand.vmem [shape: bf16[2,32,128], index: 6, kind: input, shape index: {}]
  %s7 = inlined_call_operand.hbm [shape: bf16[2,32,128], index: 7, kind: input, shape index: {}]
  %s8 = inlined_call_operand.hbm [shape: f32[2,1,128], index: 8, kind: input, shape index: {}]
  %s9 = inlined_call_operand.vmem [shape: f32[128,128], index: 9, kind: output, shape index: {}]
  %s10 = sld [smem:[#allocation0]]
  $region70: #{forward.1} parent=0
    _
  %s12 = ssub.s32 1, %s10
  %s13 = scalar_select 0, %s12, %s10
  $region1: #{forward.1} parent=0
    #allocation2 [shape = 'u8[24576]{0}', space=vmem, size = 0x6000, scoped, tag = 'input window, operand 2, single buffered']
    #allocation3 [shape = 's32[1]{0}', space=sflag, size = 0x4, scoped, tag = 'scoped memory for forward.1']
    #allocation4 [shape = 'u8[1536]{0}', space=vmem, size = 0x800, scoped, tag = 'input window, operand 3, single buffered']
    #allocation5 [shape = 's32[1]{0}', space=sflag, size = 0x4, scoped, tag = 'scoped memory for forward.1']
    #allocation6 [shape = 'u8[24576]{0}', space=vmem, size = 0x6000, scoped, tag = 'input window, operand 4, single buffered']
    #allocation7 [shape = 'u8[1536]{0}', space=vmem, size = 0x800, scoped, tag = 'input window, operand 5, single buffered']
    #allocation8 [shape = 's32[1]{0}', space=sflag, size = 0x4, scoped, tag = 'scoped memory for forward.1']
    #allocation9 [shape = 'u8[16384]{0}', space=vmem, size = 0x4000, scoped, tag = 'input window, operand 7, single buffered']
    #allocation10 [shape = 'u8[1024]{0}', space=vmem, size = 0x400, scoped, tag = 'input window, operand 8, single buffered']
    #allocation11 [shape = 's32[1]{0}', space=sflag, size = 0x4, scoped, tag = 'scoped memory for forward.1']
    %14 = vsyncpa [#allocation3], 0
    %15 = vsyncpa [#allocation5], 0
    %16 = vsyncpa [#allocation8], 0
    %17 = vsyncpa [#allocation11], 0
    // Predicated region
    $region2: #{forward.1} parent=1 // pred_check
      _
    $region3: #{forward.1} parent=1 // pred_check_branch
      %19 = sbr.rel (0) target = $region5
    $region4: #{forward.1} parent=1 // pred_region
      _
    $region5: #{forward.1} parent=1 // pred_fallthru
      _
    // Predicated region
    $region6: #{forward.1} parent=1 // pred_check
      _
    $region7: #{forward.1} parent=1 // pred_check_branch
      %21 = sbr.rel (0) target = $region9
    $region8: #{forward.1} parent=1 // pred_region
      _
    $region9: #{forward.1} parent=1 // pred_fallthru
      _
    // Predicated region
    $region10: #{forward.1} parent=1 // pred_check
      _
    $region11: #{forward.1} parent=1 // pred_check_branch
      %23 = sbr.rel (0) target = $region13
    $region12: #{forward.1} parent=1 // pred_region
      %25 = vsyncadd [#allocation3], 0
      %s26 = sshll.u32 %s2, 4
      %s27 = int_to_ptr.hbm [resolvable:$true] %s26
      %s28 = sshll.u32 [#allocation2], 4
      %s29 = int_to_ptr.vmem [resolvable:$true] %s28
      %34 = dma.hbm_to_vmem [thread:$0]  %s27, 768, %s29, [#allocation3], 64, 64, 4
    $region13: #{forward.1} parent=1 // pred_fallthru
      _
    // Predicated region
    $region14: #{forward.1} parent=1 // pred_check
      _
    $region15: #{forward.1} parent=1 // pred_check_branch
      %36 = sbr.rel (0) target = $region17
    $region16: #{forward.1} parent=1 // pred_region
      %38 = vsyncadd [#allocation5], 0
      %s39 = sshll.u32 %s3, 4
      %s40 = int_to_ptr.hbm [resolvable:$true] %s39
      %s41 = sshll.u32 [#allocation4], 4
      %s42 = int_to_ptr.vmem [resolvable:$true] %s41
      %47 = dma.hbm_to_vmem [thread:$0]  %s40, 48, %s42, [#allocation5], 16, 16, 1
    $region17: #{forward.1} parent=1 // pred_fallthru
      _
    // Predicated region
    $region18: #{forward.1} parent=1 // pred_check
      _
    $region19: #{forward.1} parent=1 // pred_check_branch
      %49 = sbr.rel (0) target = $region21
    $region20: #{forward.1} parent=1 // pred_region
      %51 = vsyncadd [#allocation5], 0
      %s52 = sshll.u32 %s4, 4
      %s53 = int_to_ptr.hbm [resolvable:$true] %s52
      %s54 = sshll.u32 [#allocation6], 4
      %s55 = int_to_ptr.vmem [resolvable:$true] %s54
      %60 = dma.hbm_to_vmem [thread:$0]  %s53, 768, %s55, [#allocation5], 64, 64, 4
    $region21: #{forward.1} parent=1 // pred_fallthru
      _
    // Predicated region
    $region22: #{forward.1} parent=1 // pred_check
      _
    $region23: #{forward.1} parent=1 // pred_check_branch
      %62 = sbr.rel (0) target = $region25
    $region24: #{forward.1} parent=1 // pred_region
      %64 = vsyncadd [#allocation8], 0
      %s65 = sshll.u32 %s5, 4
      %s66 = int_to_ptr.hbm [resolvable:$true] %s65
      %s67 = sshll.u32 [#allocation7], 4
      %s68 = int_to_ptr.vmem [resolvable:$true] %s67
      %73 = dma.hbm_to_vmem [thread:$0]  %s66, 48, %s68, [#allocation8], 16, 16, 1
    $region25: #{forward.1} parent=1 // pred_fallthru
      _
    // Predicated region
    $region26: #{forward.1} parent=1 // pred_check
      _
    $region27: #{forward.1} parent=1 // pred_check_branch
      %75 = sbr.rel (0) target = $region29
    $region28: #{forward.1} parent=1 // pred_region
      _
    $region29: #{forward.1} parent=1 // pred_fallthru
      _
    // Predicated region
    $region30: #{forward.1} parent=1 // pred_check
      _
    $region31: #{forward.1} parent=1 // pred_check_branch
      %77 = sbr.rel (0) target = $region33
    $region32: #{forward.1} parent=1 // pred_region
      %79 = vsyncadd [#allocation8], 0
      %s80 = sshll.u32 %s7, 4
      %s81 = int_to_ptr.hbm [resolvable:$true] %s80
      %s82 = sshll.u32 [#allocation9], 4
      %s83 = int_to_ptr.vmem [resolvable:$true] %s82
      %88 = dma.hbm_to_vmem [thread:$0]  %s81, 512, %s83, [#allocation8], 64, 64, 4
    $region33: #{forward.1} parent=1 // pred_fallthru
      _
    // Predicated region
    $region34: #{forward.1} parent=1 // pred_check
      _
    $region35: #{forward.1} parent=1 // pred_check_branch
      %90 = sbr.rel (0) target = $region37
    $region36: #{forward.1} parent=1 // pred_region
      %92 = vsyncadd [#allocation11], 0
      %s93 = sshll.u32 %s8, 4
      %s94 = int_to_ptr.hbm [resolvable:$true] %s93
      %s95 = sshll.u32 [#allocation10], 4
      %s96 = int_to_ptr.vmem [resolvable:$true] %s95
      %101 = dma.hbm_to_vmem [thread:$0]  %s94, 32, %s96, [#allocation11], 16, 16, 1
    $region37: #{forward.1} parent=1 // pred_fallthru
      _
    // Predicated region
    $region38: #{forward.1} parent=1 // pred_check
      _
    $region39: #{forward.1} parent=1 // pred_check_branch
      %103 = sbr.rel (0) target = $region41
    $region40: #{forward.1} parent=1 // pred_region
      %105 = dma.done [#allocation3], 768
    $region41: #{forward.1} parent=1 // pred_fallthru
      _
    // Predicated region
    $region42: #{forward.1} parent=1 // pred_check
      _
    $region43: #{forward.1} parent=1 // pred_check_branch
      %107 = sbr.rel (0) target = $region45
    $region44: #{forward.1} parent=1 // pred_region
      %109 = dma.done [#allocation5], 48
    $region45: #{forward.1} parent=1 // pred_fallthru
      _
    // Predicated region
    $region46: #{forward.1} parent=1 // pred_check
      _
    $region47: #{forward.1} parent=1 // pred_check_branch
      %111 = sbr.rel (0) target = $region49
    $region48: #{forward.1} parent=1 // pred_region
      %113 = dma.done [#allocation5], 768
    $region49: #{forward.1} parent=1 // pred_fallthru
      _
    // Predicated region
    $region50: #{forward.1} parent=1 // pred_check
      _
    $region51: #{forward.1} parent=1 // pred_check_branch
      %115 = sbr.rel (0) target = $region53
    $region52: #{forward.1} parent=1 // pred_region
      %117 = dma.done [#allocation8], 48
    $region53: #{forward.1} parent=1 // pred_fallthru
      _
    // Predicated region
    $region54: #{forward.1} parent=1 // pred_check
      _
    $region55: #{forward.1} parent=1 // pred_check_branch
      %119 = sbr.rel (0) target = $region57
    $region56: #{forward.1} parent=1 // pred_region
      %121 = dma.done [#allocation8], 512
    $region57: #{forward.1} parent=1 // pred_fallthru
      _
    // Predicated region
    $region58: #{forward.1} parent=1 // pred_check
      _
    $region59: #{forward.1} parent=1 // pred_check_branch
      %123 = sbr.rel (0) target = $region61
    $region60: #{forward.1} parent=1 // pred_region
      %125 = dma.done [#allocation11], 32
    $region61: #{forward.1} parent=1 // pred_fallthru
      _
    %v127 = vld [vmem:[%s0] sm:$0xf]
    %v128 = vld [vmem:[%s0 + $0x4] sm:$0xf]
    %v129 = vld [vmem:[%s0 + $0x8] sm:$0xf]
    %v130 = vld [vmem:[%s0 + $0xc] sm:$0xf]
    %v131 = vld [vmem:[%s0 + $0x10] sm:$0xf]
    %v132 = vld [vmem:[%s0 + $0x14] sm:$0xf]
    %v133 = vld [vmem:[%s0 + $0x18] sm:$0xf]
    %v134 = vld [vmem:[%s0 + $0x1c] sm:$0xf]
    %v135 = vld [vmem:[%s1] sm:$0xf]
    %v136 = vld [vmem:[%s1 + $0x4] sm:$0xf]
    %v137 = vld [vmem:[%s1 + $0x8] sm:$0xf]
    %v138 = vld [vmem:[%s1 + $0xc] sm:$0xf]
    %v139 = vld [vmem:[%s1 + $0x10] sm:$0xf]
    %v140 = vld [vmem:[%s1 + $0x14] sm:$0xf]
    %v141 = vld [vmem:[%s1 + $0x18] sm:$0xf]
    %v142 = vld [vmem:[%s1 + $0x1c] sm:$0xf]
    %v151 = vunpack.c.l.b16 %v135
    %v152 = vunpack.c.l.b16 %v136
    %v153 = vunpack.c.l.b16 %v137
    %v154 = vunpack.c.l.b16 %v138
    %v155 = vunpack.c.l.b16 %v139
    %v156 = vunpack.c.l.b16 %v140
    %v157 = vunpack.c.l.b16 %v141
    %v158 = vunpack.c.l.b16 %v142
    %v159 = vpack.c.b16 %v152, %v151
    %v160 = vpack.c.b16 %v154, %v153
    %v161 = vpack.c.b16 %v156, %v155
    %v162 = vpack.c.b16 %v158, %v157
    %v171 = vunpack.c.l.b16 %v127
    %v172 = vunpack.c.l.b16 %v128
    %v173 = vunpack.c.l.b16 %v129
    %v174 = vunpack.c.l.b16 %v130
    %v175 = vunpack.c.l.b16 %v131
    %v176 = vunpack.c.l.b16 %v132
    %v177 = vunpack.c.l.b16 %v133
    %v178 = vunpack.c.l.b16 %v134
    %v179 = vpack.c.b16 %v172, %v171
    %v180 = vpack.c.b16 %v174, %v173
    %v181 = vpack.c.b16 %v176, %v175
    %v182 = vpack.c.b16 %v178, %v177
    %vm187 = vcmask 523264
    %v189 = vsel %vm187, %v159, 0
    %v192 = vsel %vm187, %v160, 0
    %v195 = vsel %vm187, %v161, 0
    %v198 = vsel %vm187, %v162, 0
    %200 = vmatpush.bf16.msra.mxu0 0
    %201 = vmatpush.bf16.msra.mxu0 0
    %202 = vmatpush.bf16.msra.mxu0 0
    %203 = vmatpush.bf16.msra.mxu0 0
    %204 = vmatpush.bf16.msra.mxu0 %v182
    %205 = vmatpush.bf16.msra.mxu0 %v181
    %206 = vmatpush.bf16.msra.mxu0 %v180
    %207 = vmatpush.bf16.msra.mxu0 %v179
    %208 = vmatmul.bf16.gmra.mxu0 %v189
    %v209 = vpop.f32.mrf.mxu0
    %v210 = vadd.f32 0.0, %v209
    %v211 = vpop.f32.mrf.mxu0
    %v212 = vadd.f32 0.0, %v211
    %213 = vmatmul.bf16.gmra.mxu0 %v192
    %v214 = vpop.f32.mrf.mxu0
    %v215 = vadd.f32 0.0, %v214
    %v216 = vpop.f32.mrf.mxu0
    %v217 = vadd.f32 0.0, %v216
    %218 = vmatmul.bf16.gmra.mxu0 %v195
    %v219 = vpop.f32.mrf.mxu0
    %v220 = vadd.f32 0.0, %v219
    %v221 = vpop.f32.mrf.mxu0
    %v222 = vadd.f32 0.0, %v221
    %223 = vmatmul.bf16.gmra.mxu0 %v198
    %v224 = vpop.f32.mrf.mxu0
    %v225 = vadd.f32 0.0, %v224
    %v226 = vpop.f32.mrf.mxu0
    %v227 = vadd.f32 0.0, %v226
    %228 = vdwg.mxu0
    %v229 = vpack.c.bf16 %v212, %v210
    %v230 = vpack.c.bf16 %v217, %v215
    %v231 = vpack.c.bf16 %v222, %v220
    %v232 = vpack.c.bf16 %v227, %v225
    %v233 = vld [vmem:[#allocation2] sm:$0xf]
    %v234 = vld [vmem:[#allocation2 + $0x4] sm:$0xf]
    %v235 = vld [vmem:[#allocation2 + $0x8] sm:$0xf]
    %v236 = vld [vmem:[#allocation2 + $0xc] sm:$0xf]
    %v237 = vld [vmem:[#allocation4] sm:$0x1]
    %v239 = vperm.slane %v237, 0
    %v245 = vunpack.c.l.b16 %v233
    %v246 = vunpack.c.l.b16 %v234
    %v247 = vunpack.c.l.b16 %v235
    %v248 = vunpack.c.l.b16 %v236
    %v249 = vpack.c.b16 %v246, %v245
    %v250 = vpack.c.b16 %v248, %v247
    %vm253 = vcmask 261120
    %v255 = vsel %vm253, %v229, 0
    %v258 = vsel %vm253, %v230, 0
    %v261 = vsel %vm253, %v231, 0
    %v264 = vsel %vm253, %v232, 0
    %266 = vmatpush.bf16.msra.mxu0 0
    %267 = vmatpush.bf16.msra.mxu0 0
    %268 = vmatpush.bf16.msra.mxu0 0
    %269 = vmatpush.bf16.msra.mxu0 0
    %270 = vmatpush.bf16.msra.mxu0 0
    %271 = vmatpush.bf16.msra.mxu0 0
    %272 = vmatpush.bf16.msra.mxu0 %v250
    %273 = vmatpush.bf16.msra.mxu0 %v249
    %274 = vmatmul.bf16.gmra.mxu0 %v255
    %v275 = vpop.f32.mrf.mxu0
    %v276 = vadd.f32 %v239, %v275
    %v277 = vpop.f32.mrf.mxu0
    %v278 = vadd.f32 %v239, %v277
    %279 = vmatmul.bf16.gmra.mxu0 %v258
    %v280 = vpop.f32.mrf.mxu0
    %v281 = vadd.f32 %v239, %v280
    %v282 = vpop.f32.mrf.mxu0
    %v283 = vadd.f32 %v239, %v282
    %284 = vmatmul.bf16.gmra.mxu0 %v261
    %v285 = vpop.f32.mrf.mxu0
    %v286 = vadd.f32 %v239, %v285
    %v287 = vpop.f32.mrf.mxu0
    %v288 = vadd.f32 %v239, %v287
    %289 = vmatmul.bf16.gmra.mxu0 %v264
    %v290 = vpop.f32.mrf.mxu0
    %v291 = vadd.f32 %v239, %v290
    %v292 = vpop.f32.mrf.mxu0
    %v293 = vadd.f32 %v239, %v292
    %294 = vdwg.mxu0
    %v295 = vmax.f32 %v276, 0.0
    %v296 = vmax.f32 %v278, 0.0
    %v297 = vmax.f32 %v281, 0.0
    %v298 = vmax.f32 %v283, 0.0
    %v299 = vmax.f32 %v286, 0.0
    %v300 = vmax.f32 %v288, 0.0
    %v301 = vmax.f32 %v291, 0.0
    %v302 = vmax.f32 %v293, 0.0
    %v303 = vadd.f32 %v295, 0.0
    %v304 = vadd.f32 %v296, 0.0
    %v305 = vadd.f32 %v297, 0.0
    %v306 = vadd.f32 %v298, 0.0
    %v307 = vadd.f32 %v299, 0.0
    %v308 = vadd.f32 %v300, 0.0
    %v309 = vadd.f32 %v301, 0.0
    %v310 = vadd.f32 %v302, 0.0
    %v311 = vld [vmem:[%s0 + $0x20] sm:$0xf]
    %v312 = vld [vmem:[%s0 + $0x24] sm:$0xf]
    %v313 = vld [vmem:[%s0 + $0x28] sm:$0xf]
    %v314 = vld [vmem:[%s0 + $0x2c] sm:$0xf]
    %v315 = vld [vmem:[%s0 + $0x30] sm:$0xf]
    %v316 = vld [vmem:[%s0 + $0x34] sm:$0xf]
    %v317 = vld [vmem:[%s0 + $0x38] sm:$0xf]
    %v318 = vld [vmem:[%s0 + $0x3c] sm:$0xf]
    %s319 = scalar_lea.vmem %s1, 32
    %v320 = vld [vmem:[%s319] sm:$0xf]
    %v321 = vld [vmem:[%s319 + $0x4] sm:$0xf]
    %v322 = vld [vmem:[%s319 + $0x8] sm:$0xf]
    %v323 = vld [vmem:[%s319 + $0xc] sm:$0xf]
    %v324 = vld [vmem:[%s319 + $0x10] sm:$0xf]
    %v325 = vld [vmem:[%s319 + $0x14] sm:$0xf]
    %v326 = vld [vmem:[%s319 + $0x18] sm:$0xf]
    %v327 = vld [vmem:[%s319 + $0x1c] sm:$0xf]
    %v336 = vunpack.c.l.b16 %v320
    %v337 = vunpack.c.l.b16 %v321
    %v338 = vunpack.c.l.b16 %v322
    %v339 = vunpack.c.l.b16 %v323
    %v340 = vunpack.c.l.b16 %v324
    %v341 = vunpack.c.l.b16 %v325
    %v342 = vunpack.c.l.b16 %v326
    %v343 = vunpack.c.l.b16 %v327
    %v344 = vpack.c.b16 %v337, %v336
    %v345 = vpack.c.b16 %v339, %v338
    %v346 = vpack.c.b16 %v341, %v340
    %v347 = vpack.c.b16 %v343, %v342
    %v356 = vunpack.c.l.b16 %v311
    %v357 = vunpack.c.l.b16 %v312
    %v358 = vunpack.c.l.b16 %v313
    %v359 = vunpack.c.l.b16 %v314
    %v360 = vunpack.c.l.b16 %v315
    %v361 = vunpack.c.l.b16 %v316
    %v362 = vunpack.c.l.b16 %v317
    %v363 = vunpack.c.l.b16 %v318
    %v364 = vpack.c.b16 %v357, %v356
    %v365 = vpack.c.b16 %v359, %v358
    %v366 = vpack.c.b16 %v361, %v360
    %v367 = vpack.c.b16 %v363, %v362
    %v373 = vsel %vm187, %v344, 0
    %v376 = vsel %vm187, %v345, 0
    %v379 = vsel %vm187, %v346, 0
    %v382 = vsel %vm187, %v347, 0
    %384 = vmatpush.bf16.msra.mxu0 0
    %385 = vmatpush.bf16.msra.mxu0 0
    %386 = vmatpush.bf16.msra.mxu0 0
    %387 = vmatpush.bf16.msra.mxu0 0
    %388 = vmatpush.bf16.msra.mxu0 %v367
    %389 = vmatpush.bf16.msra.mxu0 %v366
    %390 = vmatpush.bf16.msra.mxu0 %v365
    %391 = vmatpush.bf16.msra.mxu0 %v364
    %392 = vmatmul.bf16.gmra.mxu0 %v373
    %v393 = vpop.f32.mrf.mxu0
    %v394 = vadd.f32 0.0, %v393
    %v395 = vpop.f32.mrf.mxu0
    %v396 = vadd.f32 0.0, %v395
    %397 = vmatmul.bf16.gmra.mxu0 %v376
    %v398 = vpop.f32.mrf.mxu0
    %v399 = vadd.f32 0.0, %v398
    %v400 = vpop.f32.mrf.mxu0
    %v401 = vadd.f32 0.0, %v400
    %402 = vmatmul.bf16.gmra.mxu0 %v379
    %v403 = vpop.f32.mrf.mxu0
    %v404 = vadd.f32 0.0, %v403
    %v405 = vpop.f32.mrf.mxu0
    %v406 = vadd.f32 0.0, %v405
    %407 = vmatmul.bf16.gmra.mxu0 %v382
    %v408 = vpop.f32.mrf.mxu0
    %v409 = vadd.f32 0.0, %v408
    %v410 = vpop.f32.mrf.mxu0
    %v411 = vadd.f32 0.0, %v410
    %412 = vdwg.mxu0
    %v413 = vpack.c.bf16 %v396, %v394
    %v414 = vpack.c.bf16 %v401, %v399
    %v415 = vpack.c.bf16 %v406, %v404
    %v416 = vpack.c.bf16 %v411, %v409
    %s417 = scalar_lea.vmem [#allocation2], 16
    %v418 = vld [vmem:[%s417] sm:$0xf]
    %v419 = vld [vmem:[%s417 + $0x4] sm:$0xf]
    %v420 = vld [vmem:[%s417 + $0x8] sm:$0xf]
    %v421 = vld [vmem:[%s417 + $0xc] sm:$0xf]
    %s422 = scalar_lea.vmem [#allocation4], 1
    %v423 = vld [vmem:[%s422] sm:$0x1]
    %v425 = vperm.slane %v423, 0
    %v431 = vunpack.c.l.b16 %v418
    %v432 = vunpack.c.l.b16 %v419
    %v433 = vunpack.c.l.b16 %v420
    %v434 = vunpack.c.l.b16 %v421
    %v435 = vpack.c.b16 %v432, %v431
    %v436 = vpack.c.b16 %v434, %v433
    %v440 = vsel %vm253, %v413, 0
    %v443 = vsel %vm253, %v414, 0
    %v446 = vsel %vm253, %v415, 0
    %v449 = vsel %vm253, %v416, 0
    %451 = vmatpush.bf16.msra.mxu0 0
    %452 = vmatpush.bf16.msra.mxu0 0
    %453 = vmatpush.bf16.msra.mxu0 0
    %454 = vmatpush.bf16.msra.mxu0 0
    %455 = vmatpush.bf16.msra.mxu0 0
    %456 = vmatpush.bf16.msra.mxu0 0
    %457 = vmatpush.bf16.msra.mxu0 %v436
    %458 = vmatpush.bf16.msra.mxu0 %v435
    %459 = vmatmul.bf16.gmra.mxu0 %v440
    %v460 = vpop.f32.mrf.mxu0
    %v461 = vadd.f32 %v425, %v460
    %v462 = vpop.f32.mrf.mxu0
    %v463 = vadd.f32 %v425, %v462
    %464 = vmatmul.bf16.gmra.mxu0 %v443
    %v465 = vpop.f32.mrf.mxu0
    %v466 = vadd.f32 %v425, %v465
    %v467 = vpop.f32.mrf.mxu0
    %v468 = vadd.f32 %v425, %v467
    %469 = vmatmul.bf16.gmra.mxu0 %v446
    %v470 = vpop.f32.mrf.mxu0
    %v471 = vadd.f32 %v425, %v470
    %v472 = vpop.f32.mrf.mxu0
    %v473 = vadd.f32 %v425, %v472
    %474 = vmatmul.bf16.gmra.mxu0 %v449
    %v475 = vpop.f32.mrf.mxu0
    %v476 = vadd.f32 %v425, %v475
    %v477 = vpop.f32.mrf.mxu0
    %v478 = vadd.f32 %v425, %v477
    %479 = vdwg.mxu0
    %v480 = vmax.f32 %v461, 0.0
    %v481 = vmax.f32 %v463, 0.0
    %v482 = vmax.f32 %v466, 0.0
    %v483 = vmax.f32 %v468, 0.0
    %v484 = vmax.f32 %v471, 0.0
    %v485 = vmax.f32 %v473, 0.0
    %v486 = vmax.f32 %v476, 0.0
    %v487 = vmax.f32 %v478, 0.0
    %v488 = vadd.f32 %v303, %v480
    %v489 = vadd.f32 %v304, %v481
    %v490 = vadd.f32 %v305, %v482
    %v491 = vadd.f32 %v306, %v483
    %v492 = vadd.f32 %v307, %v484
    %v493 = vadd.f32 %v308, %v485
    %v494 = vadd.f32 %v309, %v486
    %v495 = vadd.f32 %v310, %v487
    %v496 = vmul.f32 %v488, 0.5
    %v497 = vmul.f32 %v489, 0.5
    %v498 = vmul.f32 %v490, 0.5
    %v499 = vmul.f32 %v491, 0.5
    %v500 = vmul.f32 %v492, 0.5
    %v501 = vmul.f32 %v493, 0.5
    %v502 = vmul.f32 %v494, 0.5
    %v503 = vmul.f32 %v495, 0.5
    %v504 = vpack.c.bf16 %v497, %v496
    %v505 = vpack.c.bf16 %v499, %v498
    %v506 = vpack.c.bf16 %v501, %v500
    %v507 = vpack.c.bf16 %v503, %v502
    %s508 = scalar_lea.vmem %s1, 64
    %v509 = vld [vmem:[%s508] sm:$0xf]
    %v510 = vld [vmem:[%s508 + $0x4] sm:$0xf]
    %v511 = vld [vmem:[%s508 + $0x8] sm:$0xf]
    %v512 = vld [vmem:[%s508 + $0xc] sm:$0xf]
    %v513 = vld [vmem:[%s508 + $0x10] sm:$0xf]
    %v514 = vld [vmem:[%s508 + $0x14] sm:$0xf]
    %v515 = vld [vmem:[%s508 + $0x18] sm:$0xf]
    %v516 = vld [vmem:[%s508 + $0x1c] sm:$0xf]
    %v525 = vunpack.c.l.b16 %v509
    %v526 = vunpack.c.l.b16 %v510
    %v527 = vunpack.c.l.b16 %v511
    %v528 = vunpack.c.l.b16 %v512
    %v529 = vunpack.c.l.b16 %v513
    %v530 = vunpack.c.l.b16 %v514
    %v531 = vunpack.c.l.b16 %v515
    %v532 = vunpack.c.l.b16 %v516
    %v533 = vpack.c.b16 %v526, %v525
    %v534 = vpack.c.b16 %v528, %v527
    %v535 = vpack.c.b16 %v530, %v529
    %v536 = vpack.c.b16 %v532, %v531
    %v538 = vsel %vm187, %v533, 0
    %v541 = vsel %vm187, %v534, 0
    %v544 = vsel %vm187, %v535, 0
    %v547 = vsel %vm187, %v536, 0
    %549 = vmatpush.bf16.msra.mxu0 0
    %550 = vmatpush.bf16.msra.mxu0 0
    %551 = vmatpush.bf16.msra.mxu0 0
    %552 = vmatpush.bf16.msra.mxu0 0
    %553 = vmatpush.bf16.msra.mxu0 %v182
    %554 = vmatpush.bf16.msra.mxu0 %v181
    %555 = vmatpush.bf16.msra.mxu0 %v180
    %556 = vmatpush.bf16.msra.mxu0 %v179
    %557 = vmatmul.bf16.gmra.mxu0 %v538
    %v558 = vpop.f32.mrf.mxu0
    %v559 = vadd.f32 0.0, %v558
    %v560 = vpop.f32.mrf.mxu0
    %v561 = vadd.f32 0.0, %v560
    %562 = vmatmul.bf16.gmra.mxu0 %v541
    %v563 = vpop.f32.mrf.mxu0
    %v564 = vadd.f32 0.0, %v563
    %v565 = vpop.f32.mrf.mxu0
    %v566 = vadd.f32 0.0, %v565
    %567 = vmatmul.bf16.gmra.mxu0 %v544
    %v568 = vpop.f32.mrf.mxu0
    %v569 = vadd.f32 0.0, %v568
    %v570 = vpop.f32.mrf.mxu0
    %v571 = vadd.f32 0.0, %v570
    %572 = vmatmul.bf16.gmra.mxu0 %v547
    %v573 = vpop.f32.mrf.mxu0
    %v574 = vadd.f32 0.0, %v573
    %v575 = vpop.f32.mrf.mxu0
    %v576 = vadd.f32 0.0, %v575
    %577 = vdwg.mxu0
    %v578 = vpack.c.bf16 %v561, %v559
    %v579 = vpack.c.bf16 %v566, %v564
    %v580 = vpack.c.bf16 %v571, %v569
    %v581 = vpack.c.bf16 %v576, %v574
    %s582 = scalar_lea.vmem [#allocation2], 32
    %v583 = vld [vmem:[%s582] sm:$0xf]
    %v584 = vld [vmem:[%s582 + $0x4] sm:$0xf]
    %v585 = vld [vmem:[%s582 + $0x8] sm:$0xf]
    %v586 = vld [vmem:[%s582 + $0xc] sm:$0xf]
    %s587 = scalar_lea.vmem [#allocation4], 2
    %v588 = vld [vmem:[%s587] sm:$0x1]
    %v590 = vperm.slane %v588, 0
    %v596 = vunpack.c.l.b16 %v583
    %v597 = vunpack.c.l.b16 %v584
    %v598 = vunpack.c.l.b16 %v585
    %v599 = vunpack.c.l.b16 %v586
    %v600 = vpack.c.b16 %v597, %v596
    %v601 = vpack.c.b16 %v599, %v598
    %v605 = vsel %vm253, %v578, 0
    %v608 = vsel %vm253, %v579, 0
    %v611 = vsel %vm253, %v580, 0
    %v614 = vsel %vm253, %v581, 0
    %616 = vmatpush.bf16.msra.mxu0 0
    %617 = vmatpush.bf16.msra.mxu0 0
    %618 = vmatpush.bf16.msra.mxu0 0
    %619 = vmatpush.bf16.msra.mxu0 0
    %620 = vmatpush.bf16.msra.mxu0 0
    %621 = vmatpush.bf16.msra.mxu0 0
    %622 = vmatpush.bf16.msra.mxu0 %v601
    %623 = vmatpush.bf16.msra.mxu0 %v600
    %624 = vmatmul.bf16.gmra.mxu0 %v605
    %v625 = vpop.f32.mrf.mxu0
    %v626 = vadd.f32 %v590, %v625
    %v627 = vpop.f32.mrf.mxu0
    %v628 = vadd.f32 %v590, %v627
    %629 = vmatmul.bf16.gmra.mxu0 %v608
    %v630 = vpop.f32.mrf.mxu0
    %v631 = vadd.f32 %v590, %v630
    %v632 = vpop.f32.mrf.mxu0
    %v633 = vadd.f32 %v590, %v632
    %634 = vmatmul.bf16.gmra.mxu0 %v611
    %v635 = vpop.f32.mrf.mxu0
    %v636 = vadd.f32 %v590, %v635
    %v637 = vpop.f32.mrf.mxu0
    %v638 = vadd.f32 %v590, %v637
    %639 = vmatmul.bf16.gmra.mxu0 %v614
    %v640 = vpop.f32.mrf.mxu0
    %v641 = vadd.f32 %v590, %v640
    %v642 = vpop.f32.mrf.mxu0
    %v643 = vadd.f32 %v590, %v642
    %644 = vdwg.mxu0
    %v645 = vmax.f32 %v626, 0.0
    %v646 = vmax.f32 %v628, 0.0
    %v647 = vmax.f32 %v631, 0.0
    %v648 = vmax.f32 %v633, 0.0
    %v649 = vmax.f32 %v636, 0.0
    %v650 = vmax.f32 %v638, 0.0
    %v651 = vmax.f32 %v641, 0.0
    %v652 = vmax.f32 %v643, 0.0
    %v653 = vadd.f32 %v645, 0.0
    %v654 = vadd.f32 %v646, 0.0
    %v655 = vadd.f32 %v647, 0.0
    %v656 = vadd.f32 %v648, 0.0
    %v657 = vadd.f32 %v649, 0.0
    %v658 = vadd.f32 %v650, 0.0
    %v659 = vadd.f32 %v651, 0.0
    %v660 = vadd.f32 %v652, 0.0
    %v661 = vpack.c.bf16 %v654, %v653
    %v662 = vpack.c.bf16 %v656, %v655
    %v663 = vpack.c.bf16 %v658, %v657
    %v664 = vpack.c.bf16 %v660, %v659
    %665 = vmatpush.bf16.msra.mxu0 0
    %666 = vmatpush.bf16.msra.mxu0 0
    %667 = vmatpush.bf16.msra.mxu0 0
    %668 = vmatpush.bf16.msra.mxu0 0
    %669 = vmatpush.bf16.msra.mxu0 %v507
    %670 = vmatpush.bf16.msra.mxu0 %v506
    %671 = vmatpush.bf16.msra.mxu0 %v505
    %672 = vmatpush.bf16.msra.mxu0 %v504
    %673 = vmatmul.bf16.gmra.mxu0 %v189
    %v674 = vpop.f32.mrf.mxu0
    %v675 = vadd.f32 0.0, %v674
    %v676 = vpop.f32.mrf.mxu0
    %v677 = vadd.f32 0.0, %v676
    %678 = vmatmul.bf16.gmra.mxu0 %v192
    %v679 = vpop.f32.mrf.mxu0
    %v680 = vadd.f32 0.0, %v679
    %v681 = vpop.f32.mrf.mxu0
    %v682 = vadd.f32 0.0, %v681
    %683 = vmatmul.bf16.gmra.mxu0 %v195
    %v684 = vpop.f32.mrf.mxu0
    %v685 = vadd.f32 0.0, %v684
    %v686 = vpop.f32.mrf.mxu0
    %v687 = vadd.f32 0.0, %v686
    %688 = vmatmul.bf16.gmra.mxu0 %v198
    %v689 = vpop.f32.mrf.mxu0
    %v690 = vadd.f32 0.0, %v689
    %v691 = vpop.f32.mrf.mxu0
    %v692 = vadd.f32 0.0, %v691
    %693 = vdwg.mxu0
    %v694 = vpack.c.bf16 %v677, %v675
    %v695 = vpack.c.bf16 %v682, %v680
    %v696 = vpack.c.bf16 %v687, %v685
    %v697 = vpack.c.bf16 %v692, %v690
    %v698 = vld [vmem:[#allocation6] sm:$0xf]
    %v699 = vld [vmem:[#allocation6 + $0x4] sm:$0xf]
    %v700 = vld [vmem:[#allocation6 + $0x8] sm:$0xf]
    %v701 = vld [vmem:[#allocation6 + $0xc] sm:$0xf]
    %v702 = vld [vmem:[#allocation7] sm:$0x1]
    %v704 = vperm.slane %v702, 0
    %v710 = vunpack.c.l.b16 %v698
    %v711 = vunpack.c.l.b16 %v699
    %v712 = vunpack.c.l.b16 %v700
    %v713 = vunpack.c.l.b16 %v701
    %v714 = vpack.c.b16 %v711, %v710
    %v715 = vpack.c.b16 %v713, %v712
    %v719 = vsel %vm253, %v694, 0
    %v722 = vsel %vm253, %v695, 0
    %v725 = vsel %vm253, %v696, 0
    %v728 = vsel %vm253, %v697, 0
    %730 = vmatpush.bf16.msra.mxu0 0
    %731 = vmatpush.bf16.msra.mxu0 0
    %732 = vmatpush.bf16.msra.mxu0 0
    %733 = vmatpush.bf16.msra.mxu0 0
    %734 = vmatpush.bf16.msra.mxu0 0
    %735 = vmatpush.bf16.msra.mxu0 0
    %736 = vmatpush.bf16.msra.mxu0 %v715
    %737 = vmatpush.bf16.msra.mxu0 %v714
    %738 = vmatmul.bf16.gmra.mxu0 %v719
    %v739 = vpop.f32.mrf.mxu0
    %v740 = vadd.f32 %v704, %v739
    %v741 = vpop.f32.mrf.mxu0
    %v742 = vadd.f32 %v704, %v741
    %743 = vmatmul.bf16.gmra.mxu0 %v722
    %v744 = vpop.f32.mrf.mxu0
    %v745 = vadd.f32 %v704, %v744
    %v746 = vpop.f32.mrf.mxu0
    %v747 = vadd.f32 %v704, %v746
    %748 = vmatmul.bf16.gmra.mxu0 %v725
    %v749 = vpop.f32.mrf.mxu0
    %v750 = vadd.f32 %v704, %v749
    %v751 = vpop.f32.mrf.mxu0
    %v752 = vadd.f32 %v704, %v751
    %753 = vmatmul.bf16.gmra.mxu0 %v728
    %v754 = vpop.f32.mrf.mxu0
    %v755 = vadd.f32 %v704, %v754
    %v756 = vpop.f32.mrf.mxu0
    %v757 = vadd.f32 %v704, %v756
    %758 = vdwg.mxu0
    %v759 = vmax.f32 %v740, 0.0
    %v760 = vmax.f32 %v742, 0.0
    %v761 = vmax.f32 %v745, 0.0
    %v762 = vmax.f32 %v747, 0.0
    %v763 = vmax.f32 %v750, 0.0
    %v764 = vmax.f32 %v752, 0.0
    %v765 = vmax.f32 %v755, 0.0
    %v766 = vmax.f32 %v757, 0.0
    %v767 = vadd.f32 %v759, 0.0
    %v768 = vadd.f32 %v760, 0.0
    %v769 = vadd.f32 %v761, 0.0
    %v770 = vadd.f32 %v762, 0.0
    %v771 = vadd.f32 %v763, 0.0
    %v772 = vadd.f32 %v764, 0.0
    %v773 = vadd.f32 %v765, 0.0
    %v774 = vadd.f32 %v766, 0.0
    %775 = vmatpush.bf16.msra.mxu0 0
    %776 = vmatpush.bf16.msra.mxu0 0
    %777 = vmatpush.bf16.msra.mxu0 0
    %778 = vmatpush.bf16.msra.mxu0 0
    %779 = vmatpush.bf16.msra.mxu0 %v664
    %780 = vmatpush.bf16.msra.mxu0 %v663
    %781 = vmatpush.bf16.msra.mxu0 %v662
    %782 = vmatpush.bf16.msra.mxu0 %v661
    %783 = vmatmul.bf16.gmra.mxu0 %v373
    %v784 = vpop.f32.mrf.mxu0
    %v785 = vadd.f32 0.0, %v784
    %v786 = vpop.f32.mrf.mxu0
    %v787 = vadd.f32 0.0, %v786
    %788 = vmatmul.bf16.gmra.mxu0 %v376
    %v789 = vpop.f32.mrf.mxu0
    %v790 = vadd.f32 0.0, %v789
    %v791 = vpop.f32.mrf.mxu0
    %v792 = vadd.f32 0.0, %v791
    %793 = vmatmul.bf16.gmra.mxu0 %v379
    %v794 = vpop.f32.mrf.mxu0
    %v795 = vadd.f32 0.0, %v794
    %v796 = vpop.f32.mrf.mxu0
    %v797 = vadd.f32 0.0, %v796
    %798 = vmatmul.bf16.gmra.mxu0 %v382
    %v799 = vpop.f32.mrf.mxu0
    %v800 = vadd.f32 0.0, %v799
    %v801 = vpop.f32.mrf.mxu0
    %v802 = vadd.f32 0.0, %v801
    %803 = vdwg.mxu0
    %v804 = vpack.c.bf16 %v787, %v785
    %v805 = vpack.c.bf16 %v792, %v790
    %v806 = vpack.c.bf16 %v797, %v795
    %v807 = vpack.c.bf16 %v802, %v800
    %s808 = scalar_lea.vmem [#allocation6], 16
    %v809 = vld [vmem:[%s808] sm:$0xf]
    %v810 = vld [vmem:[%s808 + $0x4] sm:$0xf]
    %v811 = vld [vmem:[%s808 + $0x8] sm:$0xf]
    %v812 = vld [vmem:[%s808 + $0xc] sm:$0xf]
    %s813 = scalar_lea.vmem [#allocation7], 1
    %v814 = vld [vmem:[%s813] sm:$0x1]
    %v816 = vperm.slane %v814, 0
    %v822 = vunpack.c.l.b16 %v809
    %v823 = vunpack.c.l.b16 %v810
    %v824 = vunpack.c.l.b16 %v811
    %v825 = vunpack.c.l.b16 %v812
    %v826 = vpack.c.b16 %v823, %v822
    %v827 = vpack.c.b16 %v825, %v824
    %v831 = vsel %vm253, %v804, 0
    %v834 = vsel %vm253, %v805, 0
    %v837 = vsel %vm253, %v806, 0
    %v840 = vsel %vm253, %v807, 0
    %842 = vmatpush.bf16.msra.mxu0 0
    %843 = vmatpush.bf16.msra.mxu0 0
    %844 = vmatpush.bf16.msra.mxu0 0
    %845 = vmatpush.bf16.msra.mxu0 0
    %846 = vmatpush.bf16.msra.mxu0 0
    %847 = vmatpush.bf16.msra.mxu0 0
    %848 = vmatpush.bf16.msra.mxu0 %v827
    %849 = vmatpush.bf16.msra.mxu0 %v826
    %850 = vmatmul.bf16.gmra.mxu0 %v831
    %v851 = vpop.f32.mrf.mxu0
    %v852 = vadd.f32 %v816, %v851
    %v853 = vpop.f32.mrf.mxu0
    %v854 = vadd.f32 %v816, %v853
    %855 = vmatmul.bf16.gmra.mxu0 %v834
    %v856 = vpop.f32.mrf.mxu0
    %v857 = vadd.f32 %v816, %v856
    %v858 = vpop.f32.mrf.mxu0
    %v859 = vadd.f32 %v816, %v858
    %860 = vmatmul.bf16.gmra.mxu0 %v837
    %v861 = vpop.f32.mrf.mxu0
    %v862 = vadd.f32 %v816, %v861
    %v863 = vpop.f32.mrf.mxu0
    %v864 = vadd.f32 %v816, %v863
    %865 = vmatmul.bf16.gmra.mxu0 %v840
    %v866 = vpop.f32.mrf.mxu0
    %v867 = vadd.f32 %v816, %v866
    %v868 = vpop.f32.mrf.mxu0
    %v869 = vadd.f32 %v816, %v868
    %870 = vdwg.mxu0
    %v871 = vmax.f32 %v852, 0.0
    %v872 = vmax.f32 %v854, 0.0
    %v873 = vmax.f32 %v857, 0.0
    %v874 = vmax.f32 %v859, 0.0
    %v875 = vmax.f32 %v862, 0.0
    %v876 = vmax.f32 %v864, 0.0
    %v877 = vmax.f32 %v867, 0.0
    %v878 = vmax.f32 %v869, 0.0
    %v879 = vadd.f32 %v767, %v871
    %v880 = vadd.f32 %v768, %v872
    %v881 = vadd.f32 %v769, %v873
    %v882 = vadd.f32 %v770, %v874
    %v883 = vadd.f32 %v771, %v875
    %v884 = vadd.f32 %v772, %v876
    %v885 = vadd.f32 %v773, %v877
    %v886 = vadd.f32 %v774, %v878
    %v887 = vmul.f32 %v879, 0.5
    %v888 = vmul.f32 %v880, 0.5
    %v889 = vmul.f32 %v881, 0.5
    %v890 = vmul.f32 %v882, 0.5
    %v891 = vmul.f32 %v883, 0.5
    %v892 = vmul.f32 %v884, 0.5
    %v893 = vmul.f32 %v885, 0.5
    %v894 = vmul.f32 %v886, 0.5
    %v895 = vpack.c.bf16 %v888, %v887
    %v896 = vpack.c.bf16 %v890, %v889
    %v897 = vpack.c.bf16 %v892, %v891
    %v898 = vpack.c.bf16 %v894, %v893
    %v899 = vld [vmem:[%s6] sm:$0xf]
    %v900 = vld [vmem:[%s6 + $0x4] sm:$0xf]
    %v901 = vld [vmem:[%s6 + $0x8] sm:$0xf]
    %v902 = vld [vmem:[%s6 + $0xc] sm:$0xf]
    %v903 = vld [vmem:[#allocation9] sm:$0xf]
    %v904 = vld [vmem:[#allocation9 + $0x4] sm:$0xf]
    %v905 = vld [vmem:[#allocation9 + $0x8] sm:$0xf]
    %v906 = vld [vmem:[#allocation9 + $0xc] sm:$0xf]
    %v911 = vunpack.c.l.b16 %v903
    %v912 = vunpack.c.l.b16 %v904
    %v913 = vunpack.c.l.b16 %v905
    %v914 = vunpack.c.l.b16 %v906
    %v915 = vpack.c.b16 %v912, %v911
    %v916 = vpack.c.b16 %v914, %v913
    %v920 = vsel %vm253, %v179, 0
    %v923 = vsel %vm253, %v180, 0
    %v926 = vsel %vm253, %v181, 0
    %v929 = vsel %vm253, %v182, 0
    %931 = vmatpush.bf16.msra.mxu0 0
    %932 = vmatpush.bf16.msra.mxu0 0
    %933 = vmatpush.bf16.msra.mxu0 0
    %934 = vmatpush.bf16.msra.mxu0 0
    %935 = vmatpush.bf16.msra.mxu0 0
    %936 = vmatpush.bf16.msra.mxu0 0
    %937 = vmatpush.bf16.msra.mxu0 %v916
    %938 = vmatpush.bf16.msra.mxu0 %v915
    %939 = vmatmul.bf16.gmra.mxu0 %v920
    %v940 = vpop.f32.mrf.mxu0
    %v941 = vadd.f32 0.0, %v940
    %v942 = vpop.f32.mrf.mxu0
    %v943 = vadd.f32 0.0, %v942
    %944 = vmatmul.bf16.gmra.mxu0 %v923
    %v945 = vpop.f32.mrf.mxu0
    %v946 = vadd.f32 0.0, %v945
    %v947 = vpop.f32.mrf.mxu0
    %v948 = vadd.f32 0.0, %v947
    %949 = vmatmul.bf16.gmra.mxu0 %v926
    %v950 = vpop.f32.mrf.mxu0
    %v951 = vadd.f32 0.0, %v950
    %v952 = vpop.f32.mrf.mxu0
    %v953 = vadd.f32 0.0, %v952
    %954 = vmatmul.bf16.gmra.mxu0 %v929
    %v955 = vpop.f32.mrf.mxu0
    %v956 = vadd.f32 0.0, %v955
    %v957 = vpop.f32.mrf.mxu0
    %v958 = vadd.f32 0.0, %v957
    %959 = vdwg.mxu0
    %v964 = vunpack.c.l.b16 %v899
    %v965 = vunpack.c.l.b16 %v900
    %v966 = vunpack.c.l.b16 %v901
    %v967 = vunpack.c.l.b16 %v902
    %v968 = vpack.c.b16 %v965, %v964
    %v969 = vpack.c.b16 %v967, %v966
    %v973 = vsel %vm253, %v895, 0
    %v976 = vsel %vm253, %v896, 0
    %v979 = vsel %vm253, %v897, 0
    %v982 = vsel %vm253, %v898, 0
    %984 = vmatpush.bf16.msra.mxu0 0
    %985 = vmatpush.bf16.msra.mxu0 0
    %986 = vmatpush.bf16.msra.mxu0 0
    %987 = vmatpush.bf16.msra.mxu0 0
    %988 = vmatpush.bf16.msra.mxu0 0
    %989 = vmatpush.bf16.msra.mxu0 0
    %990 = vmatpush.bf16.msra.mxu0 %v969
    %991 = vmatpush.bf16.msra.mxu0 %v968
    %992 = vmatmul.bf16.gmra.mxu0 %v973
    %v993 = vpop.f32.mrf.mxu0
    %v994 = vadd.f32 %v941, %v993
    %v995 = vpop.f32.mrf.mxu0
    %v996 = vadd.f32 %v943, %v995
    %997 = vmatmul.bf16.gmra.mxu0 %v976
    %v998 = vpop.f32.mrf.mxu0
    %v999 = vadd.f32 %v946, %v998
    %v1000 = vpop.f32.mrf.mxu0
    %v1001 = vadd.f32 %v948, %v1000
    %1002 = vmatmul.bf16.gmra.mxu0 %v979
    %v1003 = vpop.f32.mrf.mxu0
    %v1004 = vadd.f32 %v951, %v1003
    %v1005 = vpop.f32.mrf.mxu0
    %v1006 = vadd.f32 %v953, %v1005
    %1007 = vmatmul.bf16.gmra.mxu0 %v982
    %v1008 = vpop.f32.mrf.mxu0
    %v1009 = vadd.f32 %v956, %v1008
    %v1010 = vpop.f32.mrf.mxu0
    %v1011 = vadd.f32 %v958, %v1010
    %1012 = vdwg.mxu0
    %v1013 = vld [vmem:[#allocation10] sm:$0x1]
    %v1015 = vperm.slane %v1013, 0
    %v1017 = vadd.f32 %v994, %v1015
    %v1018 = vadd.f32 %v996, %v1015
    %v1019 = vadd.f32 %v999, %v1015
    %v1020 = vadd.f32 %v1001, %v1015
    %v1021 = vadd.f32 %v1004, %v1015
    %v1022 = vadd.f32 %v1006, %v1015
    %v1023 = vadd.f32 %v1009, %v1015
    %v1024 = vadd.f32 %v1011, %v1015
    %1025 = vst [vmem:[%s9] sm:$0xff] %v1017
    %1026 = vst [vmem:[%s9 + $0x8] sm:$0xff] %v1018
    %1027 = vst [vmem:[%s9 + $0x10] sm:$0xff] %v1019
    %1028 = vst [vmem:[%s9 + $0x18] sm:$0xff] %v1020
    %1029 = vst [vmem:[%s9 + $0x20] sm:$0xff] %v1021
    %1030 = vst [vmem:[%s9 + $0x28] sm:$0xff] %v1022
    %1031 = vst [vmem:[%s9 + $0x30] sm:$0xff] %v1023
    %1032 = vst [vmem:[%s9 + $0x38] sm:$0xff] %v1024
    %v1033 = vld [vmem:[%s508] sm:$0xf]
    %v1034 = vld [vmem:[%s508 + $0x4] sm:$0xf]
    %v1035 = vld [vmem:[%s508 + $0x8] sm:$0xf]
    %v1036 = vld [vmem:[%s508 + $0xc] sm:$0xf]
    %v1037 = vld [vmem:[%s508 + $0x10] sm:$0xf]
    %v1038 = vld [vmem:[%s508 + $0x14] sm:$0xf]
    %v1039 = vld [vmem:[%s508 + $0x18] sm:$0xf]
    %v1040 = vld [vmem:[%s508 + $0x1c] sm:$0xf]
    %v1049 = vunpack.c.l.b16 %v1033
    %v1050 = vunpack.c.l.b16 %v1034
    %v1051 = vunpack.c.l.b16 %v1035
    %v1052 = vunpack.c.l.b16 %v1036
    %v1053 = vunpack.c.l.b16 %v1037
    %v1054 = vunpack.c.l.b16 %v1038
    %v1055 = vunpack.c.l.b16 %v1039
    %v1056 = vunpack.c.l.b16 %v1040
    %v1057 = vpack.c.b16 %v1050, %v1049
    %v1058 = vpack.c.b16 %v1052, %v1051
    %v1059 = vpack.c.b16 %v1054, %v1053
    %v1060 = vpack.c.b16 %v1056, %v1055
    %v1062 = vsel %vm187, %v1057, 0
    %v1065 = vsel %vm187, %v1058, 0
    %v1068 = vsel %vm187, %v1059, 0
    %v1071 = vsel %vm187, %v1060, 0
    %1073 = vmatpush.bf16.msra.mxu0 0
    %1074 = vmatpush.bf16.msra.mxu0 0
    %1075 = vmatpush.bf16.msra.mxu0 0
    %1076 = vmatpush.bf16.msra.mxu0 0
    %1077 = vmatpush.bf16.msra.mxu0 %v507
    %1078 = vmatpush.bf16.msra.mxu0 %v506
    %1079 = vmatpush.bf16.msra.mxu0 %v505
    %1080 = vmatpush.bf16.msra.mxu0 %v504
    %1081 = vmatmul.bf16.gmra.mxu0 %v1062
    %v1082 = vpop.f32.mrf.mxu0
    %v1083 = vadd.f32 0.0, %v1082
    %v1084 = vpop.f32.mrf.mxu0
    %v1085 = vadd.f32 0.0, %v1084
    %1086 = vmatmul.bf16.gmra.mxu0 %v1065
    %v1087 = vpop.f32.mrf.mxu0
    %v1088 = vadd.f32 0.0, %v1087
    %v1089 = vpop.f32.mrf.mxu0
    %v1090 = vadd.f32 0.0, %v1089
    %1091 = vmatmul.bf16.gmra.mxu0 %v1068
    %v1092 = vpop.f32.mrf.mxu0
    %v1093 = vadd.f32 0.0, %v1092
    %v1094 = vpop.f32.mrf.mxu0
    %v1095 = vadd.f32 0.0, %v1094
    %1096 = vmatmul.bf16.gmra.mxu0 %v1071
    %v1097 = vpop.f32.mrf.mxu0
    %v1098 = vadd.f32 0.0, %v1097
    %v1099 = vpop.f32.mrf.mxu0
    %v1100 = vadd.f32 0.0, %v1099
    %1101 = vdwg.mxu0
    %v1102 = vpack.c.bf16 %v1085, %v1083
    %v1103 = vpack.c.bf16 %v1090, %v1088
    %v1104 = vpack.c.bf16 %v1095, %v1093
    %v1105 = vpack.c.bf16 %v1100, %v1098
    %s1106 = scalar_lea.vmem [#allocation6], 32
    %v1107 = vld [vmem:[%s1106] sm:$0xf]
    %v1108 = vld [vmem:[%s1106 + $0x4] sm:$0xf]
    %v1109 = vld [vmem:[%s1106 + $0x8] sm:$0xf]
    %v1110 = vld [vmem:[%s1106 + $0xc] sm:$0xf]
    %s1111 = scalar_lea.vmem [#allocation7], 2
    %v1112 = vld [vmem:[%s1111] sm:$0x1]
    %v1114 = vperm.slane %v1112, 0
    %v1120 = vunpack.c.l.b16 %v1107
    %v1121 = vunpack.c.l.b16 %v1108
    %v1122 = vunpack.c.l.b16 %v1109
    %v1123 = vunpack.c.l.b16 %v1110
    %v1124 = vpack.c.b16 %v1121, %v1120
    %v1125 = vpack.c.b16 %v1123, %v1122
    %v1129 = vsel %vm253, %v1102, 0
    %v1132 = vsel %vm253, %v1103, 0
    %v1135 = vsel %vm253, %v1104, 0
    %v1138 = vsel %vm253, %v1105, 0
    %1140 = vmatpush.bf16.msra.mxu0 0
    %1141 = vmatpush.bf16.msra.mxu0 0
    %1142 = vmatpush.bf16.msra.mxu0 0
    %1143 = vmatpush.bf16.msra.mxu0 0
    %1144 = vmatpush.bf16.msra.mxu0 0
    %1145 = vmatpush.bf16.msra.mxu0 0
    %1146 = vmatpush.bf16.msra.mxu0 %v1125
    %1147 = vmatpush.bf16.msra.mxu0 %v1124
    %1148 = vmatmul.bf16.gmra.mxu0 %v1129
    %v1149 = vpop.f32.mrf.mxu0
    %v1150 = vadd.f32 %v1114, %v1149
    %v1151 = vpop.f32.mrf.mxu0
    %v1152 = vadd.f32 %v1114, %v1151
    %1153 = vmatmul.bf16.gmra.mxu0 %v1132
    %v1154 = vpop.f32.mrf.mxu0
    %v1155 = vadd.f32 %v1114, %v1154
    %v1156 = vpop.f32.mrf.mxu0
    %v1157 = vadd.f32 %v1114, %v1156
    %1158 = vmatmul.bf16.gmra.mxu0 %v1135
    %v1159 = vpop.f32.mrf.mxu0
    %v1160 = vadd.f32 %v1114, %v1159
    %v1161 = vpop.f32.mrf.mxu0
    %v1162 = vadd.f32 %v1114, %v1161
    %1163 = vmatmul.bf16.gmra.mxu0 %v1138
    %v1164 = vpop.f32.mrf.mxu0
    %v1165 = vadd.f32 %v1114, %v1164
    %v1166 = vpop.f32.mrf.mxu0
    %v1167 = vadd.f32 %v1114, %v1166
    %1168 = vdwg.mxu0
    %v1169 = vmax.f32 %v1150, 0.0
    %v1170 = vmax.f32 %v1152, 0.0
    %v1171 = vmax.f32 %v1155, 0.0
    %v1172 = vmax.f32 %v1157, 0.0
    %v1173 = vmax.f32 %v1160, 0.0
    %v1174 = vmax.f32 %v1162, 0.0
    %v1175 = vmax.f32 %v1165, 0.0
    %v1176 = vmax.f32 %v1167, 0.0
    %v1177 = vadd.f32 %v1169, 0.0
    %v1178 = vadd.f32 %v1170, 0.0
    %v1179 = vadd.f32 %v1171, 0.0
    %v1180 = vadd.f32 %v1172, 0.0
    %v1181 = vadd.f32 %v1173, 0.0
    %v1182 = vadd.f32 %v1174, 0.0
    %v1183 = vadd.f32 %v1175, 0.0
    %v1184 = vadd.f32 %v1176, 0.0
    %v1185 = vpack.c.bf16 %v1178, %v1177
    %v1186 = vpack.c.bf16 %v1180, %v1179
    %v1187 = vpack.c.bf16 %v1182, %v1181
    %v1188 = vpack.c.bf16 %v1184, %v1183
    %v1189 = vld [vmem:[%s0 + $0x20] sm:$0xf]
    %v1190 = vld [vmem:[%s0 + $0x24] sm:$0xf]
    %v1191 = vld [vmem:[%s0 + $0x28] sm:$0xf]
    %v1192 = vld [vmem:[%s0 + $0x2c] sm:$0xf]
    %v1193 = vld [vmem:[%s0 + $0x30] sm:$0xf]
    %v1194 = vld [vmem:[%s0 + $0x34] sm:$0xf]
    %v1195 = vld [vmem:[%s0 + $0x38] sm:$0xf]
    %v1196 = vld [vmem:[%s0 + $0x3c] sm:$0xf]
    %s1197 = scalar_lea.vmem %s6, 16
    %v1198 = vld [vmem:[%s1197] sm:$0xf]
    %v1199 = vld [vmem:[%s1197 + $0x4] sm:$0xf]
    %v1200 = vld [vmem:[%s1197 + $0x8] sm:$0xf]
    %v1201 = vld [vmem:[%s1197 + $0xc] sm:$0xf]
    %s1202 = scalar_lea.vmem [#allocation9], 16
    %v1203 = vld [vmem:[%s1202] sm:$0xf]
    %v1204 = vld [vmem:[%s1202 + $0x4] sm:$0xf]
    %v1205 = vld [vmem:[%s1202 + $0x8] sm:$0xf]
    %v1206 = vld [vmem:[%s1202 + $0xc] sm:$0xf]
    %v1215 = vunpack.c.l.b16 %v1189
    %v1216 = vunpack.c.l.b16 %v1190
    %v1217 = vunpack.c.l.b16 %v1191
    %v1218 = vunpack.c.l.b16 %v1192
    %v1219 = vunpack.c.l.b16 %v1193
    %v1220 = vunpack.c.l.b16 %v1194
    %v1221 = vunpack.c.l.b16 %v1195
    %v1222 = vunpack.c.l.b16 %v1196
    %v1223 = vpack.c.b16 %v1216, %v1215
    %v1224 = vpack.c.b16 %v1218, %v1217
    %v1225 = vpack.c.b16 %v1220, %v1219
    %v1226 = vpack.c.b16 %v1222, %v1221
    %v1231 = vunpack.c.l.b16 %v1203
    %v1232 = vunpack.c.l.b16 %v1204
    %v1233 = vunpack.c.l.b16 %v1205
    %v1234 = vunpack.c.l.b16 %v1206
    %v1235 = vpack.c.b16 %v1232, %v1231
    %v1236 = vpack.c.b16 %v1234, %v1233
    %v1240 = vsel %vm253, %v1223, 0
    %v1243 = vsel %vm253, %v1224, 0
    %v1246 = vsel %vm253, %v1225, 0
    %v1249 = vsel %vm253, %v1226, 0
    %1251 = vmatpush.bf16.msra.mxu0 0
    %1252 = vmatpush.bf16.msra.mxu0 0
    %1253 = vmatpush.bf16.msra.mxu0 0
    %1254 = vmatpush.bf16.msra.mxu0 0
    %1255 = vmatpush.bf16.msra.mxu0 0
    %1256 = vmatpush.bf16.msra.mxu0 0
    %1257 = vmatpush.bf16.msra.mxu0 %v1236
    %1258 = vmatpush.bf16.msra.mxu0 %v1235
    %1259 = vmatmul.bf16.gmra.mxu0 %v1240
    %v1260 = vpop.f32.mrf.mxu0
    %v1261 = vadd.f32 0.0, %v1260
    %v1262 = vpop.f32.mrf.mxu0
    %v1263 = vadd.f32 0.0, %v1262
    %1264 = vmatmul.bf16.gmra.mxu0 %v1243
    %v1265 = vpop.f32.mrf.mxu0
    %v1266 = vadd.f32 0.0, %v1265
    %v1267 = vpop.f32.mrf.mxu0
    %v1268 = vadd.f32 0.0, %v1267
    %1269 = vmatmul.bf16.gmra.mxu0 %v1246
    %v1270 = vpop.f32.mrf.mxu0
    %v1271 = vadd.f32 0.0, %v1270
    %v1272 = vpop.f32.mrf.mxu0
    %v1273 = vadd.f32 0.0, %v1272
    %1274 = vmatmul.bf16.gmra.mxu0 %v1249
    %v1275 = vpop.f32.mrf.mxu0
    %v1276 = vadd.f32 0.0, %v1275
    %v1277 = vpop.f32.mrf.mxu0
    %v1278 = vadd.f32 0.0, %v1277
    %1279 = vdwg.mxu0
    %v1284 = vunpack.c.l.b16 %v1198
    %v1285 = vunpack.c.l.b16 %v1199
    %v1286 = vunpack.c.l.b16 %v1200
    %v1287 = vunpack.c.l.b16 %v1201
    %v1288 = vpack.c.b16 %v1285, %v1284
    %v1289 = vpack.c.b16 %v1287, %v1286
    %v1293 = vsel %vm253, %v1185, 0
    %v1296 = vsel %vm253, %v1186, 0
    %v1299 = vsel %vm253, %v1187, 0
    %v1302 = vsel %vm253, %v1188, 0
    %1304 = vmatpush.bf16.msra.mxu0 0
    %1305 = vmatpush.bf16.msra.mxu0 0
    %1306 = vmatpush.bf16.msra.mxu0 0
    %1307 = vmatpush.bf16.msra.mxu0 0
    %1308 = vmatpush.bf16.msra.mxu0 0
    %1309 = vmatpush.bf16.msra.mxu0 0
    %1310 = vmatpush.bf16.msra.mxu0 %v1289
    %1311 = vmatpush.bf16.msra.mxu0 %v1288
    %1312 = vmatmul.bf16.gmra.mxu0 %v1293
    %v1313 = vpop.f32.mrf.mxu0
    %v1314 = vadd.f32 %v1261, %v1313
    %v1315 = vpop.f32.mrf.mxu0
    %v1316 = vadd.f32 %v1263, %v1315
    %1317 = vmatmul.bf16.gmra.mxu0 %v1296
    %v1318 = vpop.f32.mrf.mxu0
    %v1319 = vadd.f32 %v1266, %v1318
    %v1320 = vpop.f32.mrf.mxu0
    %v1321 = vadd.f32 %v1268, %v1320
    %1322 = vmatmul.bf16.gmra.mxu0 %v1299
    %v1323 = vpop.f32.mrf.mxu0
    %v1324 = vadd.f32 %v1271, %v1323
    %v1325 = vpop.f32.mrf.mxu0
    %v1326 = vadd.f32 %v1273, %v1325
    %1327 = vmatmul.bf16.gmra.mxu0 %v1302
    %v1328 = vpop.f32.mrf.mxu0
    %v1329 = vadd.f32 %v1276, %v1328
    %v1330 = vpop.f32.mrf.mxu0
    %v1331 = vadd.f32 %v1278, %v1330
    %1332 = vdwg.mxu0
    %s1333 = scalar_lea.vmem [#allocation10], 1
    %v1334 = vld [vmem:[%s1333] sm:$0x1]
    %v1336 = vperm.slane %v1334, 0
    %v1338 = vadd.f32 %v1314, %v1336
    %v1339 = vadd.f32 %v1316, %v1336
    %v1340 = vadd.f32 %v1319, %v1336
    %v1341 = vadd.f32 %v1321, %v1336
    %v1342 = vadd.f32 %v1324, %v1336
    %v1343 = vadd.f32 %v1326, %v1336
    %v1344 = vadd.f32 %v1329, %v1336
    %v1345 = vadd.f32 %v1331, %v1336
    %1346 = vst [vmem:[%s9 + $0x40] sm:$0xff] %v1338
    %1347 = vst [vmem:[%s9 + $0x48] sm:$0xff] %v1339
    %1348 = vst [vmem:[%s9 + $0x50] sm:$0xff] %v1340
    %1349 = vst [vmem:[%s9 + $0x58] sm:$0xff] %v1341
    %1350 = vst [vmem:[%s9 + $0x60] sm:$0xff] %v1342
    %1351 = vst [vmem:[%s9 + $0x68] sm:$0xff] %v1343
    %1352 = vst [vmem:[%s9 + $0x70] sm:$0xff] %v1344
    %1353 = vst [vmem:[%s9 + $0x78] sm:$0xff] %v1345
    // Predicated region
    $region62: #{forward.1} parent=1 // pred_check
      _
    $region63: #{forward.1} parent=1 // pred_check_branch
      %1355 = sbr.rel (0) target = $region65
    $region64: #{forward.1} parent=1 // pred_region
      _
    $region65: #{forward.1} parent=1 // pred_fallthru
      _
    // Predicated region
    $region66: #{forward.1} parent=1 // pred_check
      _
    $region67: #{forward.1} parent=1 // pred_check_branch
      %1357 = sbr.rel (0) target = $region69
    $region68: #{forward.1} parent=1 // pred_region
      _
    $region69: #{forward.1} parent=1 // pred_fallthru
      _
    %1358 = vsyncpa [#allocation3], 1
    %1359 = vsyncpa [#allocation5], 1
    %1360 = vsyncpa [#allocation8], 1
    %1361 = vsyncpa [#allocation11], 1

</llo_original>
